<compile_context>
chip_gen: v6e
topology: v6e:2x2x1
jax: 0.10.0
libtpu: 0.0.40
codegen_flags: <defaults>
</compile_context>

<pallas_src>
import functools

import jax
import jax.numpy as jnp
from jax import lax
from jax.experimental import pallas as pl
from jax.experimental.pallas import tpu as pltpu


def _resblock_kernel(x_ref, w1_ref, w2_ref, mask_ref, o_ref, taps_ref, *, H, W):
    HW = H * W
    GC = x_ref.shape[0]

    x = x_ref[...]        # (GC, HW) f32 packed features
    mask = mask_ref[...]  # (9*GC, HW) pre-broadcast border masks (center-tap rows = 1)

    def conv3x3(feat, w):
        # Write the 9 statically lane-rotated taps straight into the persistent
        # VMEM scratch (shared by both convs).
        for k in range(9):
            dy, dx = k // 3, k % 3
            s = (dy - 1) * W + (dx - 1)        # flat source offset of this tap
            sh = (-s) % HW                     # static lane-roll amount
            shifted = feat if sh == 0 else pltpu.roll(feat, sh, axis=1)
            taps_ref[k * GC:(k + 1) * GC, :] = shifted
        # ONE full-block multiply zeroes every lane whose 3x3 source pixel wrapped
        # across the image border (also kills cross-image wrap in the packed layout).
        taps_ref[...] = taps_ref[...] * mask
        # ONE fused MXU matmul applies all 9 taps to every packed image.
        # f32 operands + HIGHEST precision keep the contraction exact; a bf16 cast
        # would halve operand traffic on v6e/v7x but is skipped to preserve the
        # 1e-3 tolerance.
        return jnp.dot(w, taps_ref[...],
                       precision=lax.Precision.HIGHEST,
                       preferred_element_type=jnp.float32)

    inv_hw = 1.0 / HW

    def instance_norm(feat):
        # Two-pass biased variance (mean, then E[(x-mean)^2]), eps=1e-5 — numerically
        # robust and matches nn.InstanceNorm2d(affine=False, track_running_stats=False).
        mean = jnp.sum(feat, axis=1, keepdims=True) * inv_hw
        centered = feat - mean
        var = jnp.sum(centered * centered, axis=1, keepdims=True) * inv_hw
        return centered * lax.rsqrt(var + 1e-5)

    y = jnp.maximum(instance_norm(conv3x3(x, w1_ref[...])), 0.0)
    z = instance_norm(conv3x3(y, w2_ref[...]))
    o_ref[...] = jnp.maximum(z + x, 0.0)


def _block_diag_tap_weights(w, G):
    """torch Conv2d weight (C, C, 3, 3) -> fused tap matrix (G*C, 9*G*C).

    W_big[g*C+o, k*G*C + h*C + i] = w[o, i, dy, dx] * (g == h), with k = dy*3+dx, so
    `W_big @ stacked_taps` applies the same conv independently to each of the G images
    packed along the sublane axis.
    """
    C = w.shape[0]
    w_k = jnp.transpose(w, (2, 3, 0, 1)).reshape(9, C, C).astype(jnp.float32)  # (9, Cout, Cin)
    eye = jnp.eye(G, dtype=jnp.float32)
    w_big = jnp.einsum("gh,koi->gokhi", eye, w_k)                              # (G,Cout,9,G,Cin)
    return w_big.reshape(G * C, 9 * G * C)


def _border_masks_big(H, W, GC):
    """Pre-broadcast (9*GC, H*W) mask: rows k*GC..(k+1)*GC-1 zero output lanes whose
    3x3 source pixel for tap k is out of bounds (center-tap rows are all ones)."""
    hh = jnp.arange(H)[:, None]
    ww = jnp.arange(W)[None, :]
    rows = []
    for k in range(9):
        dy, dx = k // 3, k % 3
        m = ((hh + dy - 1 >= 0) & (hh + dy - 1 < H)
             & (ww + dx - 1 >= 0) & (ww + dx - 1 < W))
        rows.append(m.reshape(H * W))
    masks = jnp.stack(rows).astype(jnp.float32)[:, None, :]          # (9, 1, HW)
    return jnp.broadcast_to(masks, (9, GC, H * W)).reshape(9 * GC, H * W)


def resblock_pallas(x_nchw, w1, w2):
    N, C, H, W = x_nchw.shape
    HW = H * W

    # Pack G whole images into the 8-row f32 sublane group.  Never grow G past 8//C
    # (block-diagonal weight fill grows as G^2); extra batch becomes extra grid steps,
    # which also lets dimension_semantics=("parallel",) shard groups across v7x's 2 TCs.
    if C < 8 and 8 % C == 0:
        G = max(1, min(8 // C, N))
    else:
        G = 1
    n_groups = -(-N // G)                    # ceil(N / G)
    N_pad = n_groups * G
    GC = G * C

    x_flat = x_nchw.reshape(N, C, HW).astype(jnp.float32)
    if N_pad != N:
        x_flat = jnp.concatenate(
            [x_flat, jnp.zeros((N_pad - N, C, HW), jnp.float32)], axis=0)
    x_packed = x_flat.reshape(n_groups * GC, HW)       # group-major, then (image, channel)

    w1_big = _block_diag_tap_weights(w1, G)            # (GC, 9*GC), VMEM-resident
    w2_big = _block_diag_tap_weights(w2, G)
    masks_big = _border_masks_big(H, W, GC)            # (9*GC, HW), VMEM-resident

    kernel = functools.partial(_resblock_kernel, H=H, W=W)
    grid_spec = pltpu.PrefetchScalarGridSpec(
        num_scalar_prefetch=0,
        grid=(n_groups,),
        in_specs=[
            pl.BlockSpec((GC, HW), lambda g: (g, 0)),          # packed feature block
            pl.BlockSpec((GC, 9 * GC), lambda g: (0, 0)),      # conv1 fused weights
            pl.BlockSpec((GC, 9 * GC), lambda g: (0, 0)),      # conv2 fused weights
            pl.BlockSpec((9 * GC, HW), lambda g: (0, 0)),      # pre-broadcast masks
        ],
        out_specs=pl.BlockSpec((GC, HW), lambda g: (g, 0)),
        # Persistent tap scratch, reused by both convs in every grid step.
        scratch_shapes=[pltpu.VMEM((9 * GC, HW), jnp.float32)],
    )
    out_packed = pl.pallas_call(
        kernel,
        out_shape=jax.ShapeDtypeStruct((n_groups * GC, HW), jnp.float32),
        grid_spec=grid_spec,
        compiler_params=pltpu.CompilerParams(
            dimension_semantics=("parallel",)),        # shards groups across TCs when >1
    )(x_packed, w1_big, w2_big, masks_big)

    # NOTE: for large images, add a lane-tiling grid axis over H*W (with per-tile
    # masks/halos) and set vmem_limit_bytes — the 9x stacked operand hits v7x's
    # 64 MiB VMEM well before v5e/v6e.  Not needed at these shapes.
    return out_packed.reshape(N_pad, C, HW)[:N].reshape(N, C, H, W)


def resblock_reference(x, w1, w2):
    """Pure-JAX reference matching the PyTorch module semantics."""
    def conv(a, w):
        return lax.conv_general_dilated(
            a, w, window_strides=(1, 1), padding=((1, 1), (1, 1)),
            dimension_numbers=("NCHW", "OIHW", "NCHW"),
            precision=lax.Precision.HIGHEST)

    def inorm(a):
        mean = jnp.mean(a, axis=(2, 3), keepdims=True)
        var = jnp.mean(jnp.square(a - mean), axis=(2, 3), keepdims=True)
        return (a - mean) * lax.rsqrt(var + 1e-5)

    y = jnp.maximum(inorm(conv(x, w1)), 0.0)
    z = inorm(conv(y, w2))
    return jnp.maximum(z + x, 0.0)


if __name__ == "__main__":
    key = jax.random.PRNGKey(0)
    N, C, H, W = 2, 4, 16, 16
    kx, k1, k2 = jax.random.split(key, 3)
    x = jax.random.normal(kx, (N, C, H, W), dtype=jnp.float32)

    # Conv2d(c, c, kernel_size=3, padding=1, bias=False): weight shape (C, C, 3, 3)
    fan_in = C * 3 * 3
    bound = 1.0 / (fan_in ** 0.5)
    w1 = jax.random.uniform(k1, (C, C, 3, 3), jnp.float32, -bound, bound)
    w2 = jax.random.uniform(k2, (C, C, 3, 3), jnp.float32, -bound, bound)

    out = jax.block_until_ready(resblock_pallas(x, w1, w2))

    ref = resblock_reference(x, w1, w2)
    assert out.shape == (N, C, H, W)
    err = float(jnp.max(jnp.abs(out - ref)))
    assert err < 1e-3, f"max abs err {err}"
    print("KERNEL_OK")
</pallas_src>

<mosaic_0001>
module attributes {stable_mosaic.version = 11 : i64} {
  func.func @_resblock_kernel(%arg0: i32, %arg1: memref<8x256xf32, #tpu.memory_space<vmem>>, %arg2: memref<8x72xf32, #tpu.memory_space<vmem>>, %arg3: memref<8x72xf32, #tpu.memory_space<vmem>>, %arg4: memref<72x256xf32, #tpu.memory_space<vmem>>, %arg5: memref<8x256xf32, #tpu.memory_space<vmem>>, %arg6: memref<72x256xf32, #tpu.memory_space<vmem>>) attributes {dimension_semantics = [#tpu.dimension_semantics<parallel>], iteration_bounds = array<i64: 1>, scalar_prefetch = 0 : i64, scratch_operands = 1 : i64, tpu.core_type = #tpu.core_type<tc>, window_params = [{transform_indices = @transform_0, window_bounds = array<i64: 8, 256>}, {pipeline_mode = #tpu.pipeline_mode<synchronous>, transform_indices = @transform_1, window_bounds = array<i64: 8, 72>}, {pipeline_mode = #tpu.pipeline_mode<synchronous>, transform_indices = @transform_2, window_bounds = array<i64: 8, 72>}, {pipeline_mode = #tpu.pipeline_mode<synchronous>, transform_indices = @transform_3, window_bounds = array<i64: 72, 256>}, {transform_indices = @transform_4, window_bounds = array<i64: 8, 256>}]} {
    %c0 = arith.constant 0 : index
    %c0_0 = arith.constant 0 : index
    %0 = vector.load %arg1[%c0, %c0_0] : memref<8x256xf32, #tpu.memory_space<vmem>>, vector<8x256xf32>
    %c0_1 = arith.constant 0 : index
    %c0_2 = arith.constant 0 : index
    %1 = vector.load %arg4[%c0_1, %c0_2] : memref<72x256xf32, #tpu.memory_space<vmem>>, vector<72x256xf32>
    %c0_3 = arith.constant 0 : index
    %c0_4 = arith.constant 0 : index
    %2 = vector.load %arg2[%c0_3, %c0_4] : memref<8x72xf32, #tpu.memory_space<vmem>>, vector<8x72xf32>
    %c17_i32 = arith.constant 17 : i32
    %3 = tpu.dynamic_rotate %0 by %c17_i32 dim 1 : vector<8x256xf32>, i32 -> vector<8x256xf32>
    %c0_5 = arith.constant 0 : index
    %c0_6 = arith.constant 0 : index
    %4 = vector.load %arg6[%c0_5, %c0_6] : memref<72x256xf32, #tpu.memory_space<vmem>>, vector<8x256xf32>
    tpu.vector_store %arg6[%c0_5, %c0_6], %3 {strides = array<i32>} : memref<72x256xf32, #tpu.memory_space<vmem>>, vector<8x256xf32>,
    %c16_i32 = arith.constant 16 : i32
    %5 = tpu.dynamic_rotate %0 by %c16_i32 dim 1 : vector<8x256xf32>, i32 -> vector<8x256xf32>
    %c8 = arith.constant 8 : index
    %c0_7 = arith.constant 0 : index
    %6 = vector.load %arg6[%c8, %c0_7] : memref<72x256xf32, #tpu.memory_space<vmem>>, vector<8x256xf32>
    tpu.vector_store %arg6[%c8, %c0_7], %5 {strides = array<i32>} : memref<72x256xf32, #tpu.memory_space<vmem>>, vector<8x256xf32>,
    %c15_i32 = arith.constant 15 : i32
    %7 = tpu.dynamic_rotate %0 by %c15_i32 dim 1 : vector<8x256xf32>, i32 -> vector<8x256xf32>
    %c16 = arith.constant 16 : index
    %c0_8 = arith.constant 0 : index
    %8 = vector.load %arg6[%c16, %c0_8] : memref<72x256xf32, #tpu.memory_space<vmem>>, vector<8x256xf32>
    tpu.vector_store %arg6[%c16, %c0_8], %7 {strides = array<i32>} : memref<72x256xf32, #tpu.memory_space<vmem>>, vector<8x256xf32>,
    %c1_i32 = arith.constant 1 : i32
    %9 = tpu.dynamic_rotate %0 by %c1_i32 dim 1 : vector<8x256xf32>, i32 -> vector<8x256xf32>
    %c24 = arith.constant 24 : index
    %c0_9 = arith.constant 0 : index
    %10 = vector.load %arg6[%c24, %c0_9] : memref<72x256xf32, #tpu.memory_space<vmem>>, vector<8x256xf32>
    tpu.vector_store %arg6[%c24, %c0_9], %9 {strides = array<i32>} : memref<72x256xf32, #tpu.memory_space<vmem>>, vector<8x256xf32>,
    %c32 = arith.constant 32 : index
    %c0_10 = arith.constant 0 : index
    %11 = vector.load %arg6[%c32, %c0_10] : memref<72x256xf32, #tpu.memory_space<vmem>>, vector<8x256xf32>
    tpu.vector_store %arg6[%c32, %c0_10], %0 {strides = array<i32>} : memref<72x256xf32, #tpu.memory_space<vmem>>, vector<8x256xf32>,
    %c255_i32 = arith.constant 255 : i32
    %12 = tpu.dynamic_rotate %0 by %c255_i32 dim 1 : vector<8x256xf32>, i32 -> vector<8x256xf32>
    %c40 = arith.constant 40 : index
    %c0_11 = arith.constant 0 : index
    %13 = vector.load %arg6[%c40, %c0_11] : memref<72x256xf32, #tpu.memory_space<vmem>>, vector<8x256xf32>
    tpu.vector_store %arg6[%c40, %c0_11], %12 {strides = array<i32>} : memref<72x256xf32, #tpu.memory_space<vmem>>, vector<8x256xf32>,
    %c241_i32 = arith.constant 241 : i32
    %14 = tpu.dynamic_rotate %0 by %c241_i32 dim 1 : vector<8x256xf32>, i32 -> vector<8x256xf32>
    %c48 = arith.constant 48 : index
    %c0_12 = arith.constant 0 : index
    %15 = vector.load %arg6[%c48, %c0_12] : memref<72x256xf32, #tpu.memory_space<vmem>>, vector<8x256xf32>
    tpu.vector_store %arg6[%c48, %c0_12], %14 {strides = array<i32>} : memref<72x256xf32, #tpu.memory_space<vmem>>, vector<8x256xf32>,
    %c240_i32 = arith.constant 240 : i32
    %16 = tpu.dynamic_rotate %0 by %c240_i32 dim 1 : vector<8x256xf32>, i32 -> vector<8x256xf32>
    %c56 = arith.constant 56 : index
    %c0_13 = arith.constant 0 : index
    %17 = vector.load %arg6[%c56, %c0_13] : memref<72x256xf32, #tpu.memory_space<vmem>>, vector<8x256xf32>
    tpu.vector_store %arg6[%c56, %c0_13], %16 {strides = array<i32>} : memref<72x256xf32, #tpu.memory_space<vmem>>, vector<8x256xf32>,
    %c239_i32 = arith.constant 239 : i32
    %18 = tpu.dynamic_rotate %0 by %c239_i32 dim 1 : vector<8x256xf32>, i32 -> vector<8x256xf32>
    %c64 = arith.constant 64 : index
    %c0_14 = arith.constant 0 : index
    %19 = vector.load %arg6[%c64, %c0_14] : memref<72x256xf32, #tpu.memory_space<vmem>>, vector<8x256xf32>
    tpu.vector_store %arg6[%c64, %c0_14], %18 {strides = array<i32>} : memref<72x256xf32, #tpu.memory_space<vmem>>, vector<8x256xf32>,
    %c0_15 = arith.constant 0 : index
    %c0_16 = arith.constant 0 : index
    %20 = vector.load %arg6[%c0_15, %c0_16] : memref<72x256xf32, #tpu.memory_space<vmem>>, vector<72x256xf32>
    %21 = arith.mulf %20, %1 : vector<72x256xf32>
    %c0_17 = arith.constant 0 : index
    %c0_18 = arith.constant 0 : index
    %22 = vector.load %arg6[%c0_17, %c0_18] : memref<72x256xf32, #tpu.memory_space<vmem>>, vector<72x256xf32>
    tpu.vector_store %arg6[%c0_17, %c0_18], %21 {strides = array<i32>} : memref<72x256xf32, #tpu.memory_space<vmem>>, vector<72x256xf32>,
    %c0_19 = arith.constant 0 : index
    %c0_20 = arith.constant 0 : index
    %23 = vector.load %arg6[%c0_19, %c0_20] : memref<72x256xf32, #tpu.memory_space<vmem>>, vector<72x256xf32>
    %cst = arith.constant dense<0.000000e+00> : vector<8x256xf32>
    %24 = tpu.matmul %2, %23, %cst {dimension_numbers = #tpu.dot_dimension_numbers<[1], [0], [0], [1], [0, 0, 1, 1], [], []>, precision = #tpu.contract_precision<fp32>} : vector<8x72xf32>, vector<72x256xf32>, vector<8x256xf32> -> vector<8x256xf32>
    %cst_21 = arith.constant dense<0.000000e+00> : vector<8xf32>
    %25 = vector.multi_reduction <add>, %24, %cst_21 [1] : vector<8x256xf32> to vector<8xf32>
    %26 = vector.shape_cast %25 : vector<8xf32> to vector<8x1xf32>
    %cst_22 = arith.constant 3.906250e-03 : f32
    %27 = vector.broadcast %cst_22 : f32 to vector<8x1xf32>
    %28 = arith.mulf %26, %27 : vector<8x1xf32>
    %29 = vector.broadcast %28 : vector<8x1xf32> to vector<8x256xf32>
    %30 = arith.subf %24, %29 : vector<8x256xf32>
    %31 = arith.mulf %30, %30 : vector<8x256xf32>
    %cst_23 = arith.constant dense<0.000000e+00> : vector<8xf32>
    %32 = vector.multi_reduction <add>, %31, %cst_23 [1] : vector<8x256xf32> to vector<8xf32>
    %33 = vector.shape_cast %32 : vector<8xf32> to vector<8x1xf32>
    %cst_24 = arith.constant 3.906250e-03 : f32
    %34 = vector.broadcast %cst_24 : f32 to vector<8x1xf32>
    %35 = arith.mulf %33, %34 : vector<8x1xf32>
    %cst_25 = arith.constant 9.99999974E-6 : f32
    %36 = vector.broadcast %cst_25 : f32 to vector<8x1xf32>
    %37 = arith.addf %35, %36 : vector<8x1xf32>
    %38 = math.rsqrt %37 : vector<8x1xf32>
    %39 = vector.broadcast %38 : vector<8x1xf32> to vector<8x256xf32>
    %40 = arith.mulf %30, %39 : vector<8x256xf32>
    %cst_26 = arith.constant 0.000000e+00 : f32
    %41 = vector.broadcast %cst_26 : f32 to vector<8x256xf32>
    %42 = arith.maximumf %40, %41 : vector<8x256xf32>
    %c0_27 = arith.constant 0 : index
    %c0_28 = arith.constant 0 : index
    %43 = vector.load %arg3[%c0_27, %c0_28] : memref<8x72xf32, #tpu.memory_space<vmem>>, vector<8x72xf32>
    %c17_i32_29 = arith.constant 17 : i32
    %44 = tpu.dynamic_rotate %42 by %c17_i32_29 dim 1 : vector<8x256xf32>, i32 -> vector<8x256xf32>
    %c0_30 = arith.constant 0 : index
    %c0_31 = arith.constant 0 : index
    %45 = vector.load %arg6[%c0_30, %c0_31] : memref<72x256xf32, #tpu.memory_space<vmem>>, vector<8x256xf32>
    tpu.vector_store %arg6[%c0_30, %c0_31], %44 {strides = array<i32>} : memref<72x256xf32, #tpu.memory_space<vmem>>, vector<8x256xf32>,
    %c16_i32_32 = arith.constant 16 : i32
    %46 = tpu.dynamic_rotate %42 by %c16_i32_32 dim 1 : vector<8x256xf32>, i32 -> vector<8x256xf32>
    %c8_33 = arith.constant 8 : index
    %c0_34 = arith.constant 0 : index
    %47 = vector.load %arg6[%c8_33, %c0_34] : memref<72x256xf32, #tpu.memory_space<vmem>>, vector<8x256xf32>
    tpu.vector_store %arg6[%c8_33, %c0_34], %46 {strides = array<i32>} : memref<72x256xf32, #tpu.memory_space<vmem>>, vector<8x256xf32>,
    %c15_i32_35 = arith.constant 15 : i32
    %48 = tpu.dynamic_rotate %42 by %c15_i32_35 dim 1 : vector<8x256xf32>, i32 -> vector<8x256xf32>
    %c16_36 = arith.constant 16 : index
    %c0_37 = arith.constant 0 : index
    %49 = vector.load %arg6[%c16_36, %c0_37] : memref<72x256xf32, #tpu.memory_space<vmem>>, vector<8x256xf32>
    tpu.vector_store %arg6[%c16_36, %c0_37], %48 {strides = array<i32>} : memref<72x256xf32, #tpu.memory_space<vmem>>, vector<8x256xf32>,
    %c1_i32_38 = arith.constant 1 : i32
    %50 = tpu.dynamic_rotate %42 by %c1_i32_38 dim 1 : vector<8x256xf32>, i32 -> vector<8x256xf32>
    %c24_39 = arith.constant 24 : index
    %c0_40 = arith.constant 0 : index
    %51 = vector.load %arg6[%c24_39, %c0_40] : memref<72x256xf32, #tpu.memory_space<vmem>>, vector<8x256xf32>
    tpu.vector_store %arg6[%c24_39, %c0_40], %50 {strides = array<i32>} : memref<72x256xf32, #tpu.memory_space<vmem>>, vector<8x256xf32>,
    %c32_41 = arith.constant 32 : index
    %c0_42 = arith.constant 0 : index
    %52 = vector.load %arg6[%c32_41, %c0_42] : memref<72x256xf32, #tpu.memory_space<vmem>>, vector<8x256xf32>
    tpu.vector_store %arg6[%c32_41, %c0_42], %42 {strides = array<i32>} : memref<72x256xf32, #tpu.memory_space<vmem>>, vector<8x256xf32>,
    %c255_i32_43 = arith.constant 255 : i32
    %53 = tpu.dynamic_rotate %42 by %c255_i32_43 dim 1 : vector<8x256xf32>, i32 -> vector<8x256xf32>
    %c40_44 = arith.constant 40 : index
    %c0_45 = arith.constant 0 : index
    %54 = vector.load %arg6[%c40_44, %c0_45] : memref<72x256xf32, #tpu.memory_space<vmem>>, vector<8x256xf32>
    tpu.vector_store %arg6[%c40_44, %c0_45], %53 {strides = array<i32>} : memref<72x256xf32, #tpu.memory_space<vmem>>, vector<8x256xf32>,
    %c241_i32_46 = arith.constant 241 : i32
    %55 = tpu.dynamic_rotate %42 by %c241_i32_46 dim 1 : vector<8x256xf32>, i32 -> vector<8x256xf32>
    %c48_47 = arith.constant 48 : index
    %c0_48 = arith.constant 0 : index
    %56 = vector.load %arg6[%c48_47, %c0_48] : memref<72x256xf32, #tpu.memory_space<vmem>>, vector<8x256xf32>
    tpu.vector_store %arg6[%c48_47, %c0_48], %55 {strides = array<i32>} : memref<72x256xf32, #tpu.memory_space<vmem>>, vector<8x256xf32>,
    %c240_i32_49 = arith.constant 240 : i32
    %57 = tpu.dynamic_rotate %42 by %c240_i32_49 dim 1 : vector<8x256xf32>, i32 -> vector<8x256xf32>
    %c56_50 = arith.constant 56 : index
    %c0_51 = arith.constant 0 : index
    %58 = vector.load %arg6[%c56_50, %c0_51] : memref<72x256xf32, #tpu.memory_space<vmem>>, vector<8x256xf32>
    tpu.vector_store %arg6[%c56_50, %c0_51], %57 {strides = array<i32>} : memref<72x256xf32, #tpu.memory_space<vmem>>, vector<8x256xf32>,
    %c239_i32_52 = arith.constant 239 : i32
    %59 = tpu.dynamic_rotate %42 by %c239_i32_52 dim 1 : vector<8x256xf32>, i32 -> vector<8x256xf32>
    %c64_53 = arith.constant 64 : index
    %c0_54 = arith.constant 0 : index
    %60 = vector.load %arg6[%c64_53, %c0_54] : memref<72x256xf32, #tpu.memory_space<vmem>>, vector<8x256xf32>
    tpu.vector_store %arg6[%c64_53, %c0_54], %59 {strides = array<i32>} : memref<72x256xf32, #tpu.memory_space<vmem>>, vector<8x256xf32>,
    %c0_55 = arith.constant 0 : index
    %c0_56 = arith.constant 0 : index
    %61 = vector.load %arg6[%c0_55, %c0_56] : memref<72x256xf32, #tpu.memory_space<vmem>>, vector<72x256xf32>
    %62 = arith.mulf %61, %1 : vector<72x256xf32>
    %c0_57 = arith.constant 0 : index
    %c0_58 = arith.constant 0 : index
    %63 = vector.load %arg6[%c0_57, %c0_58] : memref<72x256xf32, #tpu.memory_space<vmem>>, vector<72x256xf32>
    tpu.vector_store %arg6[%c0_57, %c0_58], %62 {strides = array<i32>} : memref<72x256xf32, #tpu.memory_space<vmem>>, vector<72x256xf32>,
    %c0_59 = arith.constant 0 : index
    %c0_60 = arith.constant 0 : index
    %64 = vector.load %arg6[%c0_59, %c0_60] : memref<72x256xf32, #tpu.memory_space<vmem>>, vector<72x256xf32>
    %cst_61 = arith.constant dense<0.000000e+00> : vector<8x256xf32>
    %65 = tpu.matmul %43, %64, %cst_61 {dimension_numbers = #tpu.dot_dimension_numbers<[1], [0], [0], [1], [0, 0, 1, 1], [], []>, precision = #tpu.contract_precision<fp32>} : vector<8x72xf32>, vector<72x256xf32>, vector<8x256xf32> -> vector<8x256xf32>
    %cst_62 = arith.constant dense<0.000000e+00> : vector<8xf32>
    %66 = vector.multi_reduction <add>, %65, %cst_62 [1] : vector<8x256xf32> to vector<8xf32>
    %67 = vector.shape_cast %66 : vector<8xf32> to vector<8x1xf32>
    %cst_63 = arith.constant 3.906250e-03 : f32
    %68 = vector.broadcast %cst_63 : f32 to vector<8x1xf32>
    %69 = arith.mulf %67, %68 : vector<8x1xf32>
    %70 = vector.broadcast %69 : vector<8x1xf32> to vector<8x256xf32>
    %71 = arith.subf %65, %70 : vector<8x256xf32>
    %72 = arith.mulf %71, %71 : vector<8x256xf32>
    %cst_64 = arith.constant dense<0.000000e+00> : vector<8xf32>
    %73 = vector.multi_reduction <add>, %72, %cst_64 [1] : vector<8x256xf32> to vector<8xf32>
    %74 = vector.shape_cast %73 : vector<8xf32> to vector<8x1xf32>
    %cst_65 = arith.constant 3.906250e-03 : f32
    %75 = vector.broadcast %cst_65 : f32 to vector<8x1xf32>
    %76 = arith.mulf %74, %75 : vector<8x1xf32>
    %cst_66 = arith.constant 9.99999974E-6 : f32
    %77 = vector.broadcast %cst_66 : f32 to vector<8x1xf32>
    %78 = arith.addf %76, %77 : vector<8x1xf32>
    %79 = math.rsqrt %78 : vector<8x1xf32>
    %80 = vector.broadcast %79 : vector<8x1xf32> to vector<8x256xf32>
    %81 = arith.mulf %71, %80 : vector<8x256xf32>
    %82 = arith.addf %81, %0 : vector<8x256xf32>
    %cst_67 = arith.constant 0.000000e+00 : f32
    %83 = vector.broadcast %cst_67 : f32 to vector<8x256xf32>
    %84 = arith.maximumf %82, %83 : vector<8x256xf32>
    %c0_68 = arith.constant 0 : index
    %c0_69 = arith.constant 0 : index
    %85 = vector.load %arg5[%c0_68, %c0_69] : memref<8x256xf32, #tpu.memory_space<vmem>>, vector<8x256xf32>
    tpu.vector_store %arg5[%c0_68, %c0_69], %84 {strides = array<i32>} : memref<8x256xf32, #tpu.memory_space<vmem>>, vector<8x256xf32>,
    return
  }
  func.func @transform_0(%arg0: i32) -> (i32, i32) {
    %c0_i32 = arith.constant 0 : i32
    %c0_i32_0 = arith.constant 0 : i32
    return %arg0, %c0_i32 : i32, i32
  }
  func.func @transform_1(%arg0: i32) -> (i32, i32) {
    %c0_i32 = arith.constant 0 : i32
    %c0_i32_0 = arith.constant 0 : i32
    %c0_i32_1 = arith.constant 0 : i32
    return %c0_i32, %c0_i32_0 : i32, i32
  }
  func.func @transform_2(%arg0: i32) -> (i32, i32) {
    %c0_i32 = arith.constant 0 : i32
    %c0_i32_0 = arith.constant 0 : i32
    %c0_i32_1 = arith.constant 0 : i32
    return %c0_i32, %c0_i32_0 : i32, i32
  }
  func.func @transform_3(%arg0: i32) -> (i32, i32) {
    %c0_i32 = arith.constant 0 : i32
    %c0_i32_0 = arith.constant 0 : i32
    %c0_i32_1 = arith.constant 0 : i32
    return %c0_i32, %c0_i32_0 : i32, i32
  }
  func.func @transform_4(%arg0: i32) -> (i32, i32) {
    %c0_i32 = arith.constant 0 : i32
    %c0_i32_0 = arith.constant 0 : i32
    return %arg0, %c0_i32 : i32, i32
  }
}

</mosaic_0001>

<llo_original>
// kernel: tpu_custom_call.1
$region0: #{tpu_custom_call.1}
  #allocation0 [shape = 'u32[]', space=smem, size = 0x4, offset = 0x4, fixed_abs, tag = 'smem constant byte address 0x4 - core index']
  #allocation1 [shape = 'u32[144,128]{1,0:T(1,128)}', space=vmem, size = 0x12000, scoped, tag = 'internal scratch']
  #allocation2 [shape = 'f32[72,256]{1,0:T(8,128)}', space=vmem, size = 0x12000, scoped, tag = 'scratch operand']
  %s0 = inlined_call_operand.hbm [shape: f32[8,256], index: 0, kind: input, shape index: {}]
  %s1 = inlined_call_operand.hbm [shape: f32[8,72], index: 1, kind: input, shape index: {}]
  %s2 = inlined_call_operand.hbm [shape: f32[8,72], index: 2, kind: input, shape index: {}]
  %s3 = inlined_call_operand.hbm [shape: f32[72,256], index: 3, kind: input, shape index: {}]
  %s4 = inlined_call_operand.hbm [shape: f32[8,256], index: 4, kind: output, shape index: {}]
  %s5 = sld [smem:[#allocation0]]
  $region42: #{tpu_custom_call.1} parent=0
    _
  %s7 = ssub.s32 1, %s5
  %s8 = scalar_select 0, %s7, %s5
  $region1: #{tpu_custom_call.1} parent=0
    #allocation3 [shape = 'u8[8192]{0}', space=vmem, size = 0x2000, scoped, tag = 'input window, operand 0, single buffered']
    #allocation4 [shape = 's32[1]{0}', space=sflag, size = 0x4, scoped, tag = 'scoped memory for tpu_custom_call.1']
    #allocation5 [shape = 's32[1]{0}', space=sflag, size = 0x4, scoped, tag = 'scoped memory for tpu_custom_call.1']
    #allocation6 [shape = 'u8[4096]{0}', space=vmem, size = 0x1000, scoped, tag = 'input window, operand 1, single buffered']
    #allocation7 [shape = 's32[1]{0}', space=sflag, size = 0x4, scoped, tag = 'scoped memory for tpu_custom_call.1']
    #allocation8 [shape = 'u8[4096]{0}', space=vmem, size = 0x1000, scoped, tag = 'input window, operand 2, single buffered']
    #allocation9 [shape = 'u8[73728]{0}', space=vmem, size = 0x12000, scoped, tag = 'input window, operand 3, single buffered']
    #allocation10 [shape = 's32[1]{0}', space=sflag, size = 0x4, scoped, tag = 'scoped memory for tpu_custom_call.1']
    #allocation11 [shape = 'u8[8192]{0}', space=vmem, size = 0x2000, scoped, tag = 'output window, operand 0, single buffered']
    %9 = vsyncpa [#allocation4], 0
    %10 = vsyncpa [#allocation7], 0
    %11 = vsyncpa [#allocation10], 0
    %12 = vsyncpa [#allocation5], 0
    // Predicated region
    $region2: #{tpu_custom_call.1} parent=1 // pred_check
      _
    $region3: #{tpu_custom_call.1} parent=1 // pred_check_branch
      %14 = sbr.rel (0) target = $region5
    $region4: #{tpu_custom_call.1} parent=1 // pred_region
      %s16 = ssub.s32 256, 256
      %17 = vsyncadd [#allocation4], %s16
      %s19 = sshll.u32 [#allocation3], 4
      %s20 = int_to_ptr.vmem [resolvable:$true] %s19
      %22 = dma.hbm_to_vmem [thread:$0]  %s0, 256, %s20, [#allocation4]
    $region5: #{tpu_custom_call.1} parent=1 // pred_fallthru
      _
    // Predicated region
    $region6: #{tpu_custom_call.1} parent=1 // pred_check
      _
    $region7: #{tpu_custom_call.1} parent=1 // pred_check_branch
      %24 = sbr.rel (0) target = $region9
    $region8: #{tpu_custom_call.1} parent=1 // pred_region
      %s26 = ssub.s32 128, 128
      %27 = vsyncadd [#allocation7], %s26
      %s29 = sshll.u32 [#allocation6], 4
      %s30 = int_to_ptr.vmem [resolvable:$true] %s29
      %32 = dma.hbm_to_vmem [thread:$0]  %s1, 128, %s30, [#allocation7]
    $region9: #{tpu_custom_call.1} parent=1 // pred_fallthru
      _
    // Predicated region
    $region10: #{tpu_custom_call.1} parent=1 // pred_check
      _
    $region11: #{tpu_custom_call.1} parent=1 // pred_check_branch
      %34 = sbr.rel (0) target = $region13
    $region12: #{tpu_custom_call.1} parent=1 // pred_region
      %s36 = ssub.s32 128, 128
      %37 = vsyncadd [#allocation7], %s36
      %s39 = sshll.u32 [#allocation8], 4
      %s40 = int_to_ptr.vmem [resolvable:$true] %s39
      %42 = dma.hbm_to_vmem [thread:$0]  %s2, 128, %s40, [#allocation7]
    $region13: #{tpu_custom_call.1} parent=1 // pred_fallthru
      _
    // Predicated region
    $region14: #{tpu_custom_call.1} parent=1 // pred_check
      _
    $region15: #{tpu_custom_call.1} parent=1 // pred_check_branch
      %44 = sbr.rel (0) target = $region17
    $region16: #{tpu_custom_call.1} parent=1 // pred_region
      %s46 = ssub.s32 2304, 2304
      %47 = vsyncadd [#allocation10], %s46
      %s48 = sshll.u32 [#allocation9], 4
      %s49 = int_to_ptr.vmem [resolvable:$true] %s48
      %54 = dma.hbm_to_vmem [thread:$0]  %s3, 2304, %s49, [#allocation10], 256, 256, 16
    $region17: #{tpu_custom_call.1} parent=1 // pred_fallthru
      _
    // Predicated region
    $region18: #{tpu_custom_call.1} parent=1 // pred_check
      _
    $region19: #{tpu_custom_call.1} parent=1 // pred_check_branch
      %56 = sbr.rel (0) target = $region21
    $region20: #{tpu_custom_call.1} parent=1 // pred_region
      %57 = dma.done [#allocation4], 256
    $region21: #{tpu_custom_call.1} parent=1 // pred_fallthru
      _
    // Predicated region
    $region22: #{tpu_custom_call.1} parent=1 // pred_check
      _
    $region23: #{tpu_custom_call.1} parent=1 // pred_check_branch
      %59 = sbr.rel (0) target = $region25
    $region24: #{tpu_custom_call.1} parent=1 // pred_region
      %60 = dma.done [#allocation7], 128
    $region25: #{tpu_custom_call.1} parent=1 // pred_fallthru
      _
    // Predicated region
    $region26: #{tpu_custom_call.1} parent=1 // pred_check
      _
    $region27: #{tpu_custom_call.1} parent=1 // pred_check_branch
      %62 = sbr.rel (0) target = $region29
    $region28: #{tpu_custom_call.1} parent=1 // pred_region
      %63 = dma.done [#allocation7], 128
    $region29: #{tpu_custom_call.1} parent=1 // pred_fallthru
      _
    // Predicated region
    $region30: #{tpu_custom_call.1} parent=1 // pred_check
      _
    $region31: #{tpu_custom_call.1} parent=1 // pred_check_branch
      %65 = sbr.rel (0) target = $region33
    $region32: #{tpu_custom_call.1} parent=1 // pred_region
      %66 = dma.done [#allocation10], 2304
    $region33: #{tpu_custom_call.1} parent=1 // pred_fallthru
      _
    %v67 = vld [vmem:[#allocation3] sm:$0xff]
    %v68 = vld [vmem:[#allocation3 + $0x8] sm:$0xff]
    %v69 = vld [vmem:[#allocation9] sm:$0xff]
    %v70 = vld [vmem:[#allocation9 + $0x8] sm:$0xff]
    %v71 = vld [vmem:[#allocation9 + $0x10] sm:$0xff]
    %v72 = vld [vmem:[#allocation9 + $0x18] sm:$0xff]
    %v73 = vld [vmem:[#allocation9 + $0x20] sm:$0xff]
    %v74 = vld [vmem:[#allocation9 + $0x28] sm:$0xff]
    %v75 = vld [vmem:[#allocation9 + $0x30] sm:$0xff]
    %v76 = vld [vmem:[#allocation9 + $0x38] sm:$0xff]
    %v77 = vld [vmem:[#allocation9 + $0x40] sm:$0xff]
    %v78 = vld [vmem:[#allocation9 + $0x48] sm:$0xff]
    %v79 = vld [vmem:[#allocation9 + $0x50] sm:$0xff]
    %v80 = vld [vmem:[#allocation9 + $0x58] sm:$0xff]
    %v81 = vld [vmem:[#allocation9 + $0x60] sm:$0xff]
    %v82 = vld [vmem:[#allocation9 + $0x68] sm:$0xff]
    %v83 = vld [vmem:[#allocation9 + $0x70] sm:$0xff]
    %v84 = vld [vmem:[#allocation9 + $0x78] sm:$0xff]
    %v85 = vld [vmem:[#allocation9 + $0x80] sm:$0xff]
    %v86 = vld [vmem:[#allocation9 + $0x88] sm:$0xff]
    %v87 = vld [vmem:[#allocation6] sm:$0xff]
    %88 = vrot.lane.b32.xlu0 %v67, 17
    %v89 = vpop.permute.xlu0 %88
    %90 = vrot.lane.b32.xlu0 %v68, 17
    %v91 = vpop.permute.xlu0 %90
    %v92 = vlaneseq
    %v93 = vand.u32 %v92, 127
    %vm94 = vcmp.lt.s32.totalorder %v93, 17
    %v95 = vsel %vm94, %v89, %v91
    %v96 = vsel %vm94, %v91, %v89
    %97 = vst [vmem:[#allocation2] sm:$0xff] %v96
    %98 = vst [vmem:[#allocation2 + $0x8] sm:$0xff] %v95
    %99 = vrot.lane.b32.xlu0 %v67, 16
    %v100 = vpop.permute.xlu0 %99
    %101 = vrot.lane.b32.xlu0 %v68, 16
    %v102 = vpop.permute.xlu0 %101
    %vm103 = vcmp.lt.s32.totalorder %v93, 16
    %v104 = vsel %vm103, %v100, %v102
    %v105 = vsel %vm103, %v102, %v100
    %106 = vst [vmem:[#allocation2 + $0x10] sm:$0xff] %v105
    %107 = vst [vmem:[#allocation2 + $0x18] sm:$0xff] %v104
    %108 = vrot.lane.b32.xlu0 %v67, 15
    %v109 = vpop.permute.xlu0 %108
    %110 = vrot.lane.b32.xlu0 %v68, 15
    %v111 = vpop.permute.xlu0 %110
    %vm112 = vcmp.lt.s32.totalorder %v93, 15
    %v113 = vsel %vm112, %v109, %v111
    %v114 = vsel %vm112, %v111, %v109
    %115 = vst [vmem:[#allocation2 + $0x20] sm:$0xff] %v114
    %116 = vst [vmem:[#allocation2 + $0x28] sm:$0xff] %v113
    %117 = vrot.lane.b32.xlu0 %v67, 1
    %v118 = vpop.permute.xlu0 %117
    %119 = vrot.lane.b32.xlu0 %v68, 1
    %v120 = vpop.permute.xlu0 %119
    %vm121 = vcmp.lt.s32.totalorder %v93, 1
    %v122 = vsel %vm121, %v118, %v120
    %v123 = vsel %vm121, %v120, %v118
    %124 = vst [vmem:[#allocation2 + $0x30] sm:$0xff] %v123
    %125 = vst [vmem:[#allocation2 + $0x38] sm:$0xff] %v122
    %126 = vst [vmem:[#allocation2 + $0x40] sm:$0xff] %v67
    %127 = vst [vmem:[#allocation2 + $0x48] sm:$0xff] %v68
    %128 = vrot.lane.b32.xlu0 %v67, 127
    %v129 = vpop.permute.xlu0 %128
    %130 = vrot.lane.b32.xlu0 %v68, 127
    %v131 = vpop.permute.xlu0 %130
    %vm132 = vcmp.lt.s32.totalorder %v93, 127
    %v133 = vsel %vm132, %v129, %v131
    %v134 = vsel %vm132, %v131, %v129
    %135 = vst [vmem:[#allocation2 + $0x50] sm:$0xff] %v133
    %136 = vst [vmem:[#allocation2 + $0x58] sm:$0xff] %v134
    %137 = vrot.lane.b32.xlu0 %v67, 113
    %v138 = vpop.permute.xlu0 %137
    %139 = vrot.lane.b32.xlu0 %v68, 113
    %v140 = vpop.permute.xlu0 %139
    %vm141 = vcmp.lt.s32.totalorder %v93, 113
    %v142 = vsel %vm141, %v138, %v140
    %v143 = vsel %vm141, %v140, %v138
    %144 = vst [vmem:[#allocation2 + $0x60] sm:$0xff] %v142
    %145 = vst [vmem:[#allocation2 + $0x68] sm:$0xff] %v143
    %146 = vrot.lane.b32.xlu0 %v67, 112
    %v147 = vpop.permute.xlu0 %146
    %148 = vrot.lane.b32.xlu0 %v68, 112
    %v149 = vpop.permute.xlu0 %148
    %vm150 = vcmp.lt.s32.totalorder %v93, 112
    %v151 = vsel %vm150, %v147, %v149
    %v152 = vsel %vm150, %v149, %v147
    %153 = vst [vmem:[#allocation2 + $0x70] sm:$0xff] %v151
    %154 = vst [vmem:[#allocation2 + $0x78] sm:$0xff] %v152
    %155 = vrot.lane.b32.xlu0 %v67, 111
    %v156 = vpop.permute.xlu0 %155
    %157 = vrot.lane.b32.xlu0 %v68, 111
    %v158 = vpop.permute.xlu0 %157
    %vm159 = vcmp.lt.s32.totalorder %v93, 111
    %v160 = vsel %vm159, %v156, %v158
    %v161 = vsel %vm159, %v158, %v156
    %162 = vst [vmem:[#allocation2 + $0x80] sm:$0xff] %v160
    %163 = vst [vmem:[#allocation2 + $0x88] sm:$0xff] %v161
    %v164 = vld [vmem:[#allocation2] sm:$0xff]
    %v165 = vld [vmem:[#allocation2 + $0x8] sm:$0xff]
    %v166 = vld [vmem:[#allocation2 + $0x10] sm:$0xff]
    %v167 = vld [vmem:[#allocation2 + $0x18] sm:$0xff]
    %v168 = vld [vmem:[#allocation2 + $0x20] sm:$0xff]
    %v169 = vld [vmem:[#allocation2 + $0x28] sm:$0xff]
    %v170 = vld [vmem:[#allocation2 + $0x30] sm:$0xff]
    %v171 = vld [vmem:[#allocation2 + $0x38] sm:$0xff]
    %v172 = vld [vmem:[#allocation2 + $0x40] sm:$0xff]
    %v173 = vld [vmem:[#allocation2 + $0x48] sm:$0xff]
    %v174 = vld [vmem:[#allocation2 + $0x50] sm:$0xff]
    %v175 = vld [vmem:[#allocation2 + $0x58] sm:$0xff]
    %v176 = vld [vmem:[#allocation2 + $0x60] sm:$0xff]
    %v177 = vld [vmem:[#allocation2 + $0x68] sm:$0xff]
    %v178 = vld [vmem:[#allocation2 + $0x70] sm:$0xff]
    %v179 = vld [vmem:[#allocation2 + $0x78] sm:$0xff]
    %v180 = vld [vmem:[#allocation2 + $0x80] sm:$0xff]
    %v181 = vld [vmem:[#allocation2 + $0x88] sm:$0xff]
    %v182 = vmul.f32 %v164, %v69
    %v183 = vmul.f32 %v165, %v70
    %v184 = vmul.f32 %v166, %v71
    %v185 = vmul.f32 %v167, %v72
    %v186 = vmul.f32 %v168, %v73
    %v187 = vmul.f32 %v169, %v74
    %v188 = vmul.f32 %v170, %v75
    %v189 = vmul.f32 %v171, %v76
    %v190 = vmul.f32 %v172, %v77
    %v191 = vmul.f32 %v173, %v78
    %v192 = vmul.f32 %v174, %v79
    %v193 = vmul.f32 %v175, %v80
    %v194 = vmul.f32 %v176, %v81
    %v195 = vmul.f32 %v177, %v82
    %v196 = vmul.f32 %v178, %v83
    %v197 = vmul.f32 %v179, %v84
    %v198 = vmul.f32 %v180, %v85
    %v199 = vmul.f32 %v181, %v86
    %200 = vst [vmem:[#allocation2] sm:$0xff] %v182
    %201 = vst [vmem:[#allocation2 + $0x8] sm:$0xff] %v183
    %202 = vst [vmem:[#allocation2 + $0x10] sm:$0xff] %v184
    %203 = vst [vmem:[#allocation2 + $0x18] sm:$0xff] %v185
    %204 = vst [vmem:[#allocation2 + $0x20] sm:$0xff] %v186
    %205 = vst [vmem:[#allocation2 + $0x28] sm:$0xff] %v187
    %206 = vst [vmem:[#allocation2 + $0x30] sm:$0xff] %v188
    %207 = vst [vmem:[#allocation2 + $0x38] sm:$0xff] %v189
    %208 = vst [vmem:[#allocation2 + $0x40] sm:$0xff] %v190
    %209 = vst [vmem:[#allocation2 + $0x48] sm:$0xff] %v191
    %210 = vst [vmem:[#allocation2 + $0x50] sm:$0xff] %v192
    %211 = vst [vmem:[#allocation2 + $0x58] sm:$0xff] %v193
    %212 = vst [vmem:[#allocation2 + $0x60] sm:$0xff] %v194
    %213 = vst [vmem:[#allocation2 + $0x68] sm:$0xff] %v195
    %214 = vst [vmem:[#allocation2 + $0x70] sm:$0xff] %v196
    %215 = vst [vmem:[#allocation2 + $0x78] sm:$0xff] %v197
    %216 = vst [vmem:[#allocation2 + $0x80] sm:$0xff] %v198
    %217 = vst [vmem:[#allocation2 + $0x88] sm:$0xff] %v199
    %v218 = vld [vmem:[#allocation2] sm:$0xff]
    %v219 = vld [vmem:[#allocation2 + $0x8] sm:$0xff]
    %v220 = vld [vmem:[#allocation2 + $0x10] sm:$0xff]
    %v221 = vld [vmem:[#allocation2 + $0x18] sm:$0xff]
    %v222 = vld [vmem:[#allocation2 + $0x20] sm:$0xff]
    %v223 = vld [vmem:[#allocation2 + $0x28] sm:$0xff]
    %v224 = vld [vmem:[#allocation2 + $0x30] sm:$0xff]
    %v225 = vld [vmem:[#allocation2 + $0x38] sm:$0xff]
    %v226 = vld [vmem:[#allocation2 + $0x40] sm:$0xff]
    %v227 = vld [vmem:[#allocation2 + $0x48] sm:$0xff]
    %v228 = vld [vmem:[#allocation2 + $0x50] sm:$0xff]
    %v229 = vld [vmem:[#allocation2 + $0x58] sm:$0xff]
    %v230 = vld [vmem:[#allocation2 + $0x60] sm:$0xff]
    %v231 = vld [vmem:[#allocation2 + $0x68] sm:$0xff]
    %v232 = vld [vmem:[#allocation2 + $0x70] sm:$0xff]
    %v233 = vld [vmem:[#allocation2 + $0x78] sm:$0xff]
    %v234 = vld [vmem:[#allocation2 + $0x80] sm:$0xff]
    %v235 = vld [vmem:[#allocation2 + $0x88] sm:$0xff]
    %vm236 = vcmask 588800
    %v238 = vsel %vm236, %v87, 0
    %240 = vmatprep.subr.mxu0 0.0
    %241 = vmatpush1.msra.mxu0 0.0
    %242 = vmatprep.subr.mxu0 0.0
    %243 = vmatpush1.msra.mxu0 0.0
    %244 = vmatprep.subr.mxu0 0.0
    %245 = vmatpush1.msra.mxu0 0.0
    %246 = vmatprep.subr.mxu0 0.0
    %247 = vmatpush1.msra.mxu0 0.0
    %248 = vmatprep.subr.mxu0 0.0
    %249 = vmatpush1.msra.mxu0 0.0
    %250 = vmatprep.subr.mxu0 0.0
    %251 = vmatpush1.msra.mxu0 0.0
    %252 = vmatprep.subr.mxu0 0.0
    %253 = vmatpush1.msra.mxu0 0.0
    %v254 = vand.u32 %v235, 4294901760
    %255 = vmatprep.subr.mxu0 %v254
    %v256 = vand.u32 %v234, 4294901760
    %257 = vmatpush1.msra.mxu0 %v256
    %v258 = vand.u32 %v233, 4294901760
    %259 = vmatprep.subr.mxu0 %v258
    %v260 = vand.u32 %v232, 4294901760
    %261 = vmatpush1.msra.mxu0 %v260
    %v262 = vand.u32 %v231, 4294901760
    %263 = vmatprep.subr.mxu0 %v262
    %v264 = vand.u32 %v230, 4294901760
    %265 = vmatpush1.msra.mxu0 %v264
    %v266 = vand.u32 %v229, 4294901760
    %267 = vmatprep.subr.mxu0 %v266
    %v268 = vand.u32 %v228, 4294901760
    %269 = vmatpush1.msra.mxu0 %v268
    %v270 = vand.u32 %v227, 4294901760
    %271 = vmatprep.subr.mxu0 %v270
    %v272 = vand.u32 %v226, 4294901760
    %273 = vmatpush1.msra.mxu0 %v272
    %v274 = vand.u32 %v225, 4294901760
    %275 = vmatprep.subr.mxu0 %v274
    %v276 = vand.u32 %v224, 4294901760
    %277 = vmatpush1.msra.mxu0 %v276
    %v278 = vand.u32 %v223, 4294901760
    %279 = vmatprep.subr.mxu0 %v278
    %v280 = vand.u32 %v222, 4294901760
    %281 = vmatpush1.msra.mxu0 %v280
    %v282 = vand.u32 %v221, 4294901760
    %283 = vmatprep.subr.mxu0 %v282
    %v284 = vand.u32 %v220, 4294901760
    %285 = vmatpush1.msra.mxu0 %v284
    %v286 = vand.u32 %v219, 4294901760
    %287 = vmatprep.subr.mxu0 %v286
    %v288 = vand.u32 %v218, 4294901760
    %289 = vmatpush1.msra.mxu0 %v288
    %290 = vmatprep.subr.mxu0 0.0
    %291 = vmatpush2.msra.mxu0 0.0
    %292 = vmatprep.subr.mxu0 0.0
    %293 = vmatpush2.msra.mxu0 0.0
    %294 = vmatprep.subr.mxu0 0.0
    %295 = vmatpush2.msra.mxu0 0.0
    %296 = vmatprep.subr.mxu0 0.0
    %297 = vmatpush2.msra.mxu0 0.0
    %298 = vmatprep.subr.mxu0 0.0
    %299 = vmatpush2.msra.mxu0 0.0
    %300 = vmatprep.subr.mxu0 0.0
    %301 = vmatpush2.msra.mxu0 0.0
    %302 = vmatprep.subr.mxu0 0.0
    %303 = vmatpush2.msra.mxu0 0.0
    %304 = vmatprep.subr.mxu0 0.0
    %305 = vmatpush2.msra.mxu0 0.0
    %306 = vmatprep.subr.mxu0 0.0
    %307 = vmatpush2.msra.mxu0 0.0
    %308 = vmatprep.subr.mxu0 0.0
    %309 = vmatpush2.msra.mxu0 0.0
    %310 = vmatprep.subr.mxu0 0.0
    %311 = vmatpush2.msra.mxu0 0.0
    %312 = vmatprep.subr.mxu0 0.0
    %313 = vmatpush2.msra.mxu0 0.0
    %314 = vmatprep.subr.mxu0 0.0
    %315 = vmatpush2.msra.mxu0 0.0
    %316 = vmatprep.subr.mxu0 0.0
    %317 = vmatpush2.msra.mxu0 0.0
    %318 = vmatprep.subr.mxu0 0.0
    %319 = vmatpush2.msra.mxu0 0.0
    %320 = vmatprep.subr.mxu0 0.0
    %321 = vmatpush2.msra.mxu0 0.0
    %322 = vmatprep.mubr.f32.mxu0 0.0
    %v323 = vand.u32 %v238, 4294901760
    %v324 = vsub.f32 %v238, %v323
    %v325 = vand.u32 %v324, 4294901760
    %v326 = vsub.f32 %v324, %v325
    %v327 = vand.u32 %v326, 4294901760
    %328 = vmatmul.mubr.f32.gmra.mxu0 %v327
    %v329 = vpop.f32.mrf.mxu0
    %v330 = vadd.f32 0.0, %v329
    %v331 = vpop.f32.mrf.mxu0
    %v332 = vadd.f32 0.0, %v331
    %333 = vdwg.mxu0
    %334 = vmatprep.subr.mxu0 0.0
    %335 = vmatpush1.msra.mxu0 0.0
    %336 = vmatprep.subr.mxu0 0.0
    %337 = vmatpush1.msra.mxu0 0.0
    %338 = vmatprep.subr.mxu0 0.0
    %339 = vmatpush1.msra.mxu0 0.0
    %340 = vmatprep.subr.mxu0 0.0
    %341 = vmatpush1.msra.mxu0 0.0
    %342 = vmatprep.subr.mxu0 0.0
    %343 = vmatpush1.msra.mxu0 0.0
    %344 = vmatprep.subr.mxu0 0.0
    %345 = vmatpush1.msra.mxu0 0.0
    %346 = vmatprep.subr.mxu0 0.0
    %347 = vmatpush1.msra.mxu0 0.0
    %v348 = vand.u32 %v235, 4294901760
    %v349 = vsub.f32 %v235, %v348
    %v350 = vand.u32 %v349, 4294901760
    %v351 = vsub.f32 %v349, %v350
    %v352 = vand.u32 %v351, 4294901760
    %353 = vmatprep.subr.mxu0 %v352
    %v354 = vand.u32 %v234, 4294901760
    %v355 = vsub.f32 %v234, %v354
    %v356 = vand.u32 %v355, 4294901760
    %v357 = vsub.f32 %v355, %v356
    %v358 = vand.u32 %v357, 4294901760
    %359 = vmatpush1.msra.mxu0 %v358
    %v360 = vand.u32 %v233, 4294901760
    %v361 = vsub.f32 %v233, %v360
    %v362 = vand.u32 %v361, 4294901760
    %v363 = vsub.f32 %v361, %v362
    %v364 = vand.u32 %v363, 4294901760
    %365 = vmatprep.subr.mxu0 %v364
    %v366 = vand.u32 %v232, 4294901760
    %v367 = vsub.f32 %v232, %v366
    %v368 = vand.u32 %v367, 4294901760
    %v369 = vsub.f32 %v367, %v368
    %v370 = vand.u32 %v369, 4294901760
    %371 = vmatpush1.msra.mxu0 %v370
    %v372 = vand.u32 %v231, 4294901760
    %v373 = vsub.f32 %v231, %v372
    %v374 = vand.u32 %v373, 4294901760
    %v375 = vsub.f32 %v373, %v374
    %v376 = vand.u32 %v375, 4294901760
    %377 = vmatprep.subr.mxu0 %v376
    %v378 = vand.u32 %v230, 4294901760
    %v379 = vsub.f32 %v230, %v378
    %v380 = vand.u32 %v379, 4294901760
    %v381 = vsub.f32 %v379, %v380
    %v382 = vand.u32 %v381, 4294901760
    %383 = vmatpush1.msra.mxu0 %v382
    %v384 = vand.u32 %v229, 4294901760
    %v385 = vsub.f32 %v229, %v384
    %v386 = vand.u32 %v385, 4294901760
    %v387 = vsub.f32 %v385, %v386
    %v388 = vand.u32 %v387, 4294901760
    %389 = vmatprep.subr.mxu0 %v388
    %v390 = vand.u32 %v228, 4294901760
    %v391 = vsub.f32 %v228, %v390
    %v392 = vand.u32 %v391, 4294901760
    %v393 = vsub.f32 %v391, %v392
    %v394 = vand.u32 %v393, 4294901760
    %395 = vmatpush1.msra.mxu0 %v394
    %v396 = vand.u32 %v227, 4294901760
    %v397 = vsub.f32 %v227, %v396
    %v398 = vand.u32 %v397, 4294901760
    %v399 = vsub.f32 %v397, %v398
    %v400 = vand.u32 %v399, 4294901760
    %401 = vmatprep.subr.mxu0 %v400
    %v402 = vand.u32 %v226, 4294901760
    %v403 = vsub.f32 %v226, %v402
    %v404 = vand.u32 %v403, 4294901760
    %v405 = vsub.f32 %v403, %v404
    %v406 = vand.u32 %v405, 4294901760
    %407 = vmatpush1.msra.mxu0 %v406
    %v408 = vand.u32 %v225, 4294901760
    %v409 = vsub.f32 %v225, %v408
    %v410 = vand.u32 %v409, 4294901760
    %v411 = vsub.f32 %v409, %v410
    %v412 = vand.u32 %v411, 4294901760
    %413 = vmatprep.subr.mxu0 %v412
    %v414 = vand.u32 %v224, 4294901760
    %v415 = vsub.f32 %v224, %v414
    %v416 = vand.u32 %v415, 4294901760
    %v417 = vsub.f32 %v415, %v416
    %v418 = vand.u32 %v417, 4294901760
    %419 = vmatpush1.msra.mxu0 %v418
    %v420 = vand.u32 %v223, 4294901760
    %v421 = vsub.f32 %v223, %v420
    %v422 = vand.u32 %v421, 4294901760
    %v423 = vsub.f32 %v421, %v422
    %v424 = vand.u32 %v423, 4294901760
    %425 = vmatprep.subr.mxu0 %v424
    %v426 = vand.u32 %v222, 4294901760
    %v427 = vsub.f32 %v222, %v426
    %v428 = vand.u32 %v427, 4294901760
    %v429 = vsub.f32 %v427, %v428
    %v430 = vand.u32 %v429, 4294901760
    %431 = vmatpush1.msra.mxu0 %v430
    %v432 = vand.u32 %v221, 4294901760
    %v433 = vsub.f32 %v221, %v432
    %v434 = vand.u32 %v433, 4294901760
    %v435 = vsub.f32 %v433, %v434
    %v436 = vand.u32 %v435, 4294901760
    %437 = vmatprep.subr.mxu0 %v436
    %v438 = vand.u32 %v220, 4294901760
    %v439 = vsub.f32 %v220, %v438
    %v440 = vand.u32 %v439, 4294901760
    %v441 = vsub.f32 %v439, %v440
    %v442 = vand.u32 %v441, 4294901760
    %443 = vmatpush1.msra.mxu0 %v442
    %v444 = vand.u32 %v219, 4294901760
    %v445 = vsub.f32 %v219, %v444
    %v446 = vand.u32 %v445, 4294901760
    %v447 = vsub.f32 %v445, %v446
    %v448 = vand.u32 %v447, 4294901760
    %449 = vmatprep.subr.mxu0 %v448
    %v450 = vand.u32 %v218, 4294901760
    %v451 = vsub.f32 %v218, %v450
    %v452 = vand.u32 %v451, 4294901760
    %v453 = vsub.f32 %v451, %v452
    %v454 = vand.u32 %v453, 4294901760
    %455 = vmatpush1.msra.mxu0 %v454
    %456 = vmatprep.subr.mxu0 0.0
    %457 = vmatpush2.msra.mxu0 0.0
    %458 = vmatprep.subr.mxu0 0.0
    %459 = vmatpush2.msra.mxu0 0.0
    %460 = vmatprep.subr.mxu0 0.0
    %461 = vmatpush2.msra.mxu0 0.0
    %462 = vmatprep.subr.mxu0 0.0
    %463 = vmatpush2.msra.mxu0 0.0
    %464 = vmatprep.subr.mxu0 0.0
    %465 = vmatpush2.msra.mxu0 0.0
    %466 = vmatprep.subr.mxu0 0.0
    %467 = vmatpush2.msra.mxu0 0.0
    %468 = vmatprep.subr.mxu0 0.0
    %469 = vmatpush2.msra.mxu0 0.0
    %470 = vmatprep.subr.mxu0 0.0
    %471 = vmatpush2.msra.mxu0 0.0
    %472 = vmatprep.subr.mxu0 0.0
    %473 = vmatpush2.msra.mxu0 0.0
    %474 = vmatprep.subr.mxu0 0.0
    %475 = vmatpush2.msra.mxu0 0.0
    %476 = vmatprep.subr.mxu0 0.0
    %477 = vmatpush2.msra.mxu0 0.0
    %478 = vmatprep.subr.mxu0 0.0
    %479 = vmatpush2.msra.mxu0 0.0
    %480 = vmatprep.subr.mxu0 0.0
    %481 = vmatpush2.msra.mxu0 0.0
    %482 = vmatprep.subr.mxu0 0.0
    %483 = vmatpush2.msra.mxu0 0.0
    %484 = vmatprep.subr.mxu0 0.0
    %485 = vmatpush2.msra.mxu0 0.0
    %486 = vmatprep.subr.mxu0 0.0
    %487 = vmatpush2.msra.mxu0 0.0
    %488 = vmatprep.mubr.f32.mxu0 0.0
    %v489 = vand.u32 %v238, 4294901760
    %490 = vmatmul.mubr.f32.gmra.mxu0 %v489
    %v491 = vpop.f32.mrf.mxu0
    %v492 = vadd.f32 %v330, %v491
    %v493 = vpop.f32.mrf.mxu0
    %v494 = vadd.f32 %v332, %v493
    %495 = vdwg.mxu0
    %496 = vmatprep.subr.mxu0 0.0
    %497 = vmatpush1.msra.mxu0 0.0
    %498 = vmatprep.subr.mxu0 0.0
    %499 = vmatpush1.msra.mxu0 0.0
    %500 = vmatprep.subr.mxu0 0.0
    %501 = vmatpush1.msra.mxu0 0.0
    %502 = vmatprep.subr.mxu0 0.0
    %503 = vmatpush1.msra.mxu0 0.0
    %504 = vmatprep.subr.mxu0 0.0
    %505 = vmatpush1.msra.mxu0 0.0
    %506 = vmatprep.subr.mxu0 0.0
    %507 = vmatpush1.msra.mxu0 0.0
    %508 = vmatprep.subr.mxu0 0.0
    %509 = vmatpush1.msra.mxu0 0.0
    %v510 = vand.u32 %v235, 4294901760
    %v511 = vsub.f32 %v235, %v510
    %512 = vmatprep.subr.mxu0 %v511
    %v513 = vand.u32 %v234, 4294901760
    %v514 = vsub.f32 %v234, %v513
    %515 = vmatpush1.msra.mxu0 %v514
    %v516 = vand.u32 %v233, 4294901760
    %v517 = vsub.f32 %v233, %v516
    %518 = vmatprep.subr.mxu0 %v517
    %v519 = vand.u32 %v232, 4294901760
    %v520 = vsub.f32 %v232, %v519
    %521 = vmatpush1.msra.mxu0 %v520
    %v522 = vand.u32 %v231, 4294901760
    %v523 = vsub.f32 %v231, %v522
    %524 = vmatprep.subr.mxu0 %v523
    %v525 = vand.u32 %v230, 4294901760
    %v526 = vsub.f32 %v230, %v525
    %527 = vmatpush1.msra.mxu0 %v526
    %v528 = vand.u32 %v229, 4294901760
    %v529 = vsub.f32 %v229, %v528
    %530 = vmatprep.subr.mxu0 %v529
    %v531 = vand.u32 %v228, 4294901760
    %v532 = vsub.f32 %v228, %v531
    %533 = vmatpush1.msra.mxu0 %v532
    %v534 = vand.u32 %v227, 4294901760
    %v535 = vsub.f32 %v227, %v534
    %536 = vmatprep.subr.mxu0 %v535
    %v537 = vand.u32 %v226, 4294901760
    %v538 = vsub.f32 %v226, %v537
    %539 = vmatpush1.msra.mxu0 %v538
    %v540 = vand.u32 %v225, 4294901760
    %v541 = vsub.f32 %v225, %v540
    %542 = vmatprep.subr.mxu0 %v541
    %v543 = vand.u32 %v224, 4294901760
    %v544 = vsub.f32 %v224, %v543
    %545 = vmatpush1.msra.mxu0 %v544
    %v546 = vand.u32 %v223, 4294901760
    %v547 = vsub.f32 %v223, %v546
    %548 = vmatprep.subr.mxu0 %v547
    %v549 = vand.u32 %v222, 4294901760
    %v550 = vsub.f32 %v222, %v549
    %551 = vmatpush1.msra.mxu0 %v550
    %v552 = vand.u32 %v221, 4294901760
    %v553 = vsub.f32 %v221, %v552
    %554 = vmatprep.subr.mxu0 %v553
    %v555 = vand.u32 %v220, 4294901760
    %v556 = vsub.f32 %v220, %v555
    %557 = vmatpush1.msra.mxu0 %v556
    %v558 = vand.u32 %v219, 4294901760
    %v559 = vsub.f32 %v219, %v558
    %560 = vmatprep.subr.mxu0 %v559
    %v561 = vand.u32 %v218, 4294901760
    %v562 = vsub.f32 %v218, %v561
    %563 = vmatpush1.msra.mxu0 %v562
    %564 = vmatprep.subr.mxu0 0.0
    %565 = vmatpush2.msra.mxu0 0.0
    %566 = vmatprep.subr.mxu0 0.0
    %567 = vmatpush2.msra.mxu0 0.0
    %568 = vmatprep.subr.mxu0 0.0
    %569 = vmatpush2.msra.mxu0 0.0
    %570 = vmatprep.subr.mxu0 0.0
    %571 = vmatpush2.msra.mxu0 0.0
    %572 = vmatprep.subr.mxu0 0.0
    %573 = vmatpush2.msra.mxu0 0.0
    %574 = vmatprep.subr.mxu0 0.0
    %575 = vmatpush2.msra.mxu0 0.0
    %576 = vmatprep.subr.mxu0 0.0
    %577 = vmatpush2.msra.mxu0 0.0
    %578 = vmatprep.subr.mxu0 0.0
    %579 = vmatpush2.msra.mxu0 0.0
    %580 = vmatprep.subr.mxu0 0.0
    %581 = vmatpush2.msra.mxu0 0.0
    %582 = vmatprep.subr.mxu0 0.0
    %583 = vmatpush2.msra.mxu0 0.0
    %584 = vmatprep.subr.mxu0 0.0
    %585 = vmatpush2.msra.mxu0 0.0
    %586 = vmatprep.subr.mxu0 0.0
    %587 = vmatpush2.msra.mxu0 0.0
    %588 = vmatprep.subr.mxu0 0.0
    %589 = vmatpush2.msra.mxu0 0.0
    %590 = vmatprep.subr.mxu0 0.0
    %591 = vmatpush2.msra.mxu0 0.0
    %592 = vmatprep.subr.mxu0 0.0
    %593 = vmatpush2.msra.mxu0 0.0
    %594 = vmatprep.subr.mxu0 0.0
    %595 = vmatpush2.msra.mxu0 0.0
    %596 = vmatprep.mubr.f32.mxu0 0.0
    %v597 = vand.u32 %v238, 4294901760
    %v598 = vsub.f32 %v238, %v597
    %599 = vmatmul.mubr.f32.gmra.mxu0 %v598
    %v600 = vpop.f32.mrf.mxu0
    %v601 = vadd.f32 %v492, %v600
    %v602 = vpop.f32.mrf.mxu0
    %v603 = vadd.f32 %v494, %v602
    %604 = vdwg.mxu0
    %605 = vmatprep.subr.mxu0 0.0
    %606 = vmatpush1.msra.mxu0 0.0
    %607 = vmatprep.subr.mxu0 0.0
    %608 = vmatpush1.msra.mxu0 0.0
    %609 = vmatprep.subr.mxu0 0.0
    %610 = vmatpush1.msra.mxu0 0.0
    %611 = vmatprep.subr.mxu0 0.0
    %612 = vmatpush1.msra.mxu0 0.0
    %613 = vmatprep.subr.mxu0 0.0
    %614 = vmatpush1.msra.mxu0 0.0
    %615 = vmatprep.subr.mxu0 0.0
    %616 = vmatpush1.msra.mxu0 0.0
    %617 = vmatprep.subr.mxu0 0.0
    %618 = vmatpush1.msra.mxu0 0.0
    %v619 = vand.u32 %v235, 4294901760
    %620 = vmatprep.subr.mxu0 %v619
    %v621 = vand.u32 %v234, 4294901760
    %622 = vmatpush1.msra.mxu0 %v621
    %v623 = vand.u32 %v233, 4294901760
    %624 = vmatprep.subr.mxu0 %v623
    %v625 = vand.u32 %v232, 4294901760
    %626 = vmatpush1.msra.mxu0 %v625
    %v627 = vand.u32 %v231, 4294901760
    %628 = vmatprep.subr.mxu0 %v627
    %v629 = vand.u32 %v230, 4294901760
    %630 = vmatpush1.msra.mxu0 %v629
    %v631 = vand.u32 %v229, 4294901760
    %632 = vmatprep.subr.mxu0 %v631
    %v633 = vand.u32 %v228, 4294901760
    %634 = vmatpush1.msra.mxu0 %v633
    %v635 = vand.u32 %v227, 4294901760
    %636 = vmatprep.subr.mxu0 %v635
    %v637 = vand.u32 %v226, 4294901760
    %638 = vmatpush1.msra.mxu0 %v637
    %v639 = vand.u32 %v225, 4294901760
    %640 = vmatprep.subr.mxu0 %v639
    %v641 = vand.u32 %v224, 4294901760
    %642 = vmatpush1.msra.mxu0 %v641
    %v643 = vand.u32 %v223, 4294901760
    %644 = vmatprep.subr.mxu0 %v643
    %v645 = vand.u32 %v222, 4294901760
    %646 = vmatpush1.msra.mxu0 %v645
    %v647 = vand.u32 %v221, 4294901760
    %648 = vmatprep.subr.mxu0 %v647
    %v649 = vand.u32 %v220, 4294901760
    %650 = vmatpush1.msra.mxu0 %v649
    %v651 = vand.u32 %v219, 4294901760
    %652 = vmatprep.subr.mxu0 %v651
    %v653 = vand.u32 %v218, 4294901760
    %654 = vmatpush1.msra.mxu0 %v653
    %655 = vmatprep.subr.mxu0 0.0
    %656 = vmatpush2.msra.mxu0 0.0
    %657 = vmatprep.subr.mxu0 0.0
    %658 = vmatpush2.msra.mxu0 0.0
    %659 = vmatprep.subr.mxu0 0.0
    %660 = vmatpush2.msra.mxu0 0.0
    %661 = vmatprep.subr.mxu0 0.0
    %662 = vmatpush2.msra.mxu0 0.0
    %663 = vmatprep.subr.mxu0 0.0
    %664 = vmatpush2.msra.mxu0 0.0
    %665 = vmatprep.subr.mxu0 0.0
    %666 = vmatpush2.msra.mxu0 0.0
    %667 = vmatprep.subr.mxu0 0.0
    %668 = vmatpush2.msra.mxu0 0.0
    %669 = vmatprep.subr.mxu0 0.0
    %670 = vmatpush2.msra.mxu0 0.0
    %671 = vmatprep.subr.mxu0 0.0
    %672 = vmatpush2.msra.mxu0 0.0
    %673 = vmatprep.subr.mxu0 0.0
    %674 = vmatpush2.msra.mxu0 0.0
    %675 = vmatprep.subr.mxu0 0.0
    %676 = vmatpush2.msra.mxu0 0.0
    %677 = vmatprep.subr.mxu0 0.0
    %678 = vmatpush2.msra.mxu0 0.0
    %679 = vmatprep.subr.mxu0 0.0
    %680 = vmatpush2.msra.mxu0 0.0
    %681 = vmatprep.subr.mxu0 0.0
    %682 = vmatpush2.msra.mxu0 0.0
    %683 = vmatprep.subr.mxu0 0.0
    %684 = vmatpush2.msra.mxu0 0.0
    %685 = vmatprep.subr.mxu0 0.0
    %686 = vmatpush2.msra.mxu0 0.0
    %687 = vmatprep.mubr.f32.mxu0 0.0
    %v688 = vand.u32 %v238, 4294901760
    %v689 = vsub.f32 %v238, %v688
    %v690 = vand.u32 %v689, 4294901760
    %691 = vmatmul.mubr.f32.gmra.mxu0 %v690
    %v692 = vpop.f32.mrf.mxu0
    %v693 = vadd.f32 %v601, %v692
    %v694 = vpop.f32.mrf.mxu0
    %v695 = vadd.f32 %v603, %v694
    %696 = vdwg.mxu0
    %697 = vmatprep.subr.mxu0 0.0
    %698 = vmatpush1.msra.mxu0 0.0
    %699 = vmatprep.subr.mxu0 0.0
    %700 = vmatpush1.msra.mxu0 0.0
    %701 = vmatprep.subr.mxu0 0.0
    %702 = vmatpush1.msra.mxu0 0.0
    %703 = vmatprep.subr.mxu0 0.0
    %704 = vmatpush1.msra.mxu0 0.0
    %705 = vmatprep.subr.mxu0 0.0
    %706 = vmatpush1.msra.mxu0 0.0
    %707 = vmatprep.subr.mxu0 0.0
    %708 = vmatpush1.msra.mxu0 0.0
    %709 = vmatprep.subr.mxu0 0.0
    %710 = vmatpush1.msra.mxu0 0.0
    %v711 = vand.u32 %v235, 4294901760
    %v712 = vsub.f32 %v235, %v711
    %v713 = vand.u32 %v712, 4294901760
    %714 = vmatprep.subr.mxu0 %v713
    %v715 = vand.u32 %v234, 4294901760
    %v716 = vsub.f32 %v234, %v715
    %v717 = vand.u32 %v716, 4294901760
    %718 = vmatpush1.msra.mxu0 %v717
    %v719 = vand.u32 %v233, 4294901760
    %v720 = vsub.f32 %v233, %v719
    %v721 = vand.u32 %v720, 4294901760
    %722 = vmatprep.subr.mxu0 %v721
    %v723 = vand.u32 %v232, 4294901760
    %v724 = vsub.f32 %v232, %v723
    %v725 = vand.u32 %v724, 4294901760
    %726 = vmatpush1.msra.mxu0 %v725
    %v727 = vand.u32 %v231, 4294901760
    %v728 = vsub.f32 %v231, %v727
    %v729 = vand.u32 %v728, 4294901760
    %730 = vmatprep.subr.mxu0 %v729
    %v731 = vand.u32 %v230, 4294901760
    %v732 = vsub.f32 %v230, %v731
    %v733 = vand.u32 %v732, 4294901760
    %734 = vmatpush1.msra.mxu0 %v733
    %v735 = vand.u32 %v229, 4294901760
    %v736 = vsub.f32 %v229, %v735
    %v737 = vand.u32 %v736, 4294901760
    %738 = vmatprep.subr.mxu0 %v737
    %v739 = vand.u32 %v228, 4294901760
    %v740 = vsub.f32 %v228, %v739
    %v741 = vand.u32 %v740, 4294901760
    %742 = vmatpush1.msra.mxu0 %v741
    %v743 = vand.u32 %v227, 4294901760
    %v744 = vsub.f32 %v227, %v743
    %v745 = vand.u32 %v744, 4294901760
    %746 = vmatprep.subr.mxu0 %v745
    %v747 = vand.u32 %v226, 4294901760
    %v748 = vsub.f32 %v226, %v747
    %v749 = vand.u32 %v748, 4294901760
    %750 = vmatpush1.msra.mxu0 %v749
    %v751 = vand.u32 %v225, 4294901760
    %v752 = vsub.f32 %v225, %v751
    %v753 = vand.u32 %v752, 4294901760
    %754 = vmatprep.subr.mxu0 %v753
    %v755 = vand.u32 %v224, 4294901760
    %v756 = vsub.f32 %v224, %v755
    %v757 = vand.u32 %v756, 4294901760
    %758 = vmatpush1.msra.mxu0 %v757
    %v759 = vand.u32 %v223, 4294901760
    %v760 = vsub.f32 %v223, %v759
    %v761 = vand.u32 %v760, 4294901760
    %762 = vmatprep.subr.mxu0 %v761
    %v763 = vand.u32 %v222, 4294901760
    %v764 = vsub.f32 %v222, %v763
    %v765 = vand.u32 %v764, 4294901760
    %766 = vmatpush1.msra.mxu0 %v765
    %v767 = vand.u32 %v221, 4294901760
    %v768 = vsub.f32 %v221, %v767
    %v769 = vand.u32 %v768, 4294901760
    %770 = vmatprep.subr.mxu0 %v769
    %v771 = vand.u32 %v220, 4294901760
    %v772 = vsub.f32 %v220, %v771
    %v773 = vand.u32 %v772, 4294901760
    %774 = vmatpush1.msra.mxu0 %v773
    %v775 = vand.u32 %v219, 4294901760
    %v776 = vsub.f32 %v219, %v775
    %v777 = vand.u32 %v776, 4294901760
    %778 = vmatprep.subr.mxu0 %v777
    %v779 = vand.u32 %v218, 4294901760
    %v780 = vsub.f32 %v218, %v779
    %v781 = vand.u32 %v780, 4294901760
    %782 = vmatpush1.msra.mxu0 %v781
    %783 = vmatprep.subr.mxu0 0.0
    %784 = vmatpush2.msra.mxu0 0.0
    %785 = vmatprep.subr.mxu0 0.0
    %786 = vmatpush2.msra.mxu0 0.0
    %787 = vmatprep.subr.mxu0 0.0
    %788 = vmatpush2.msra.mxu0 0.0
    %789 = vmatprep.subr.mxu0 0.0
    %790 = vmatpush2.msra.mxu0 0.0
    %791 = vmatprep.subr.mxu0 0.0
    %792 = vmatpush2.msra.mxu0 0.0
    %793 = vmatprep.subr.mxu0 0.0
    %794 = vmatpush2.msra.mxu0 0.0
    %795 = vmatprep.subr.mxu0 0.0
    %796 = vmatpush2.msra.mxu0 0.0
    %797 = vmatprep.subr.mxu0 0.0
    %798 = vmatpush2.msra.mxu0 0.0
    %799 = vmatprep.subr.mxu0 0.0
    %800 = vmatpush2.msra.mxu0 0.0
    %801 = vmatprep.subr.mxu0 0.0
    %802 = vmatpush2.msra.mxu0 0.0
    %803 = vmatprep.subr.mxu0 0.0
    %804 = vmatpush2.msra.mxu0 0.0
    %805 = vmatprep.subr.mxu0 0.0
    %806 = vmatpush2.msra.mxu0 0.0
    %807 = vmatprep.subr.mxu0 0.0
    %808 = vmatpush2.msra.mxu0 0.0
    %809 = vmatprep.subr.mxu0 0.0
    %810 = vmatpush2.msra.mxu0 0.0
    %811 = vmatprep.subr.mxu0 0.0
    %812 = vmatpush2.msra.mxu0 0.0
    %813 = vmatprep.subr.mxu0 0.0
    %814 = vmatpush2.msra.mxu0 0.0
    %815 = vmatprep.mubr.f32.mxu0 0.0
    %v816 = vand.u32 %v238, 4294901760
    %817 = vmatmul.mubr.f32.gmra.mxu0 %v816
    %v818 = vpop.f32.mrf.mxu0
    %v819 = vadd.f32 %v693, %v818
    %v820 = vpop.f32.mrf.mxu0
    %v821 = vadd.f32 %v695, %v820
    %822 = vdwg.mxu0
    %823 = vmatprep.subr.mxu0 0.0
    %824 = vmatpush1.msra.mxu0 0.0
    %825 = vmatprep.subr.mxu0 0.0
    %826 = vmatpush1.msra.mxu0 0.0
    %827 = vmatprep.subr.mxu0 0.0
    %828 = vmatpush1.msra.mxu0 0.0
    %829 = vmatprep.subr.mxu0 0.0
    %830 = vmatpush1.msra.mxu0 0.0
    %831 = vmatprep.subr.mxu0 0.0
    %832 = vmatpush1.msra.mxu0 0.0
    %833 = vmatprep.subr.mxu0 0.0
    %834 = vmatpush1.msra.mxu0 0.0
    %835 = vmatprep.subr.mxu0 0.0
    %836 = vmatpush1.msra.mxu0 0.0
    %v837 = vand.u32 %v235, 4294901760
    %838 = vmatprep.subr.mxu0 %v837
    %v839 = vand.u32 %v234, 4294901760
    %840 = vmatpush1.msra.mxu0 %v839
    %v841 = vand.u32 %v233, 4294901760
    %842 = vmatprep.subr.mxu0 %v841
    %v843 = vand.u32 %v232, 4294901760
    %844 = vmatpush1.msra.mxu0 %v843
    %v845 = vand.u32 %v231, 4294901760
    %846 = vmatprep.subr.mxu0 %v845
    %v847 = vand.u32 %v230, 4294901760
    %848 = vmatpush1.msra.mxu0 %v847
    %v849 = vand.u32 %v229, 4294901760
    %850 = vmatprep.subr.mxu0 %v849
    %v851 = vand.u32 %v228, 4294901760
    %852 = vmatpush1.msra.mxu0 %v851
    %v853 = vand.u32 %v227, 4294901760
    %854 = vmatprep.subr.mxu0 %v853
    %v855 = vand.u32 %v226, 4294901760
    %856 = vmatpush1.msra.mxu0 %v855
    %v857 = vand.u32 %v225, 4294901760
    %858 = vmatprep.subr.mxu0 %v857
    %v859 = vand.u32 %v224, 4294901760
    %860 = vmatpush1.msra.mxu0 %v859
    %v861 = vand.u32 %v223, 4294901760
    %862 = vmatprep.subr.mxu0 %v861
    %v863 = vand.u32 %v222, 4294901760
    %864 = vmatpush1.msra.mxu0 %v863
    %v865 = vand.u32 %v221, 4294901760
    %866 = vmatprep.subr.mxu0 %v865
    %v867 = vand.u32 %v220, 4294901760
    %868 = vmatpush1.msra.mxu0 %v867
    %v869 = vand.u32 %v219, 4294901760
    %870 = vmatprep.subr.mxu0 %v869
    %v871 = vand.u32 %v218, 4294901760
    %872 = vmatpush1.msra.mxu0 %v871
    %873 = vmatprep.subr.mxu0 0.0
    %874 = vmatpush2.msra.mxu0 0.0
    %875 = vmatprep.subr.mxu0 0.0
    %876 = vmatpush2.msra.mxu0 0.0
    %877 = vmatprep.subr.mxu0 0.0
    %878 = vmatpush2.msra.mxu0 0.0
    %879 = vmatprep.subr.mxu0 0.0
    %880 = vmatpush2.msra.mxu0 0.0
    %881 = vmatprep.subr.mxu0 0.0
    %882 = vmatpush2.msra.mxu0 0.0
    %883 = vmatprep.subr.mxu0 0.0
    %884 = vmatpush2.msra.mxu0 0.0
    %885 = vmatprep.subr.mxu0 0.0
    %886 = vmatpush2.msra.mxu0 0.0
    %887 = vmatprep.subr.mxu0 0.0
    %888 = vmatpush2.msra.mxu0 0.0
    %889 = vmatprep.subr.mxu0 0.0
    %890 = vmatpush2.msra.mxu0 0.0
    %891 = vmatprep.subr.mxu0 0.0
    %892 = vmatpush2.msra.mxu0 0.0
    %893 = vmatprep.subr.mxu0 0.0
    %894 = vmatpush2.msra.mxu0 0.0
    %895 = vmatprep.subr.mxu0 0.0
    %896 = vmatpush2.msra.mxu0 0.0
    %897 = vmatprep.subr.mxu0 0.0
    %898 = vmatpush2.msra.mxu0 0.0
    %899 = vmatprep.subr.mxu0 0.0
    %900 = vmatpush2.msra.mxu0 0.0
    %901 = vmatprep.subr.mxu0 0.0
    %902 = vmatpush2.msra.mxu0 0.0
    %903 = vmatprep.subr.mxu0 0.0
    %904 = vmatpush2.msra.mxu0 0.0
    %905 = vmatprep.mubr.f32.mxu0 0.0
    %v906 = vand.u32 %v238, 4294901760
    %907 = vmatmul.mubr.f32.gmra.mxu0 %v906
    %v908 = vpop.f32.mrf.mxu0
    %v909 = vadd.f32 %v819, %v908
    %v910 = vpop.f32.mrf.mxu0
    %v911 = vadd.f32 %v821, %v910
    %912 = vdwg.mxu0
    %v913 = vadd.f32 %v909, %v911
    %914 = vadd.xlane.f32.xlu0 %v913
    %v915 = vpop.xlane.xlu0 %914
    %v916 = vmul.f32 %v915, 0.00390625
    %v917 = vsub.f32 %v909, %v916
    %v918 = vsub.f32 %v911, %v916
    %v919 = vmul.f32 %v917, %v917
    %v920 = vmul.f32 %v918, %v918
    %v921 = vadd.f32 %v919, %v920
    %922 = vadd.xlane.f32.xlu0 %v921
    %v923 = vpop.xlane.xlu0 %922
    %v924 = vmul.f32 %v923, 0.00390625
    %v925 = vadd.f32 %v924, 1e-05
    %v926 = vrsqrt.pop %v925
    %v927 = vmul.f32 %v917, %v926
    %v928 = vmul.f32 %v918, %v926
    %v929 = vmax.f32 %v927, 0.0
    %v930 = vmax.f32 %v928, 0.0
    %v931 = vld [vmem:[#allocation8] sm:$0xff]
    %932 = vrot.lane.b32.xlu0 %v929, 17
    %v933 = vpop.permute.xlu0 %932
    %934 = vrot.lane.b32.xlu0 %v930, 17
    %v935 = vpop.permute.xlu0 %934
    %v936 = vsel %vm94, %v933, %v935
    %v937 = vsel %vm94, %v935, %v933
    %938 = vst [vmem:[#allocation2] sm:$0xff] %v937
    %939 = vst [vmem:[#allocation2 + $0x8] sm:$0xff] %v936
    %940 = vrot.lane.b32.xlu0 %v929, 16
    %v941 = vpop.permute.xlu0 %940
    %942 = vrot.lane.b32.xlu0 %v930, 16
    %v943 = vpop.permute.xlu0 %942
    %v944 = vsel %vm103, %v941, %v943
    %v945 = vsel %vm103, %v943, %v941
    %946 = vst [vmem:[#allocation2 + $0x10] sm:$0xff] %v945
    %947 = vst [vmem:[#allocation2 + $0x18] sm:$0xff] %v944
    %948 = vrot.lane.b32.xlu0 %v929, 15
    %v949 = vpop.permute.xlu0 %948
    %950 = vrot.lane.b32.xlu0 %v930, 15
    %v951 = vpop.permute.xlu0 %950
    %v952 = vsel %vm112, %v949, %v951
    %v953 = vsel %vm112, %v951, %v949
    %954 = vst [vmem:[#allocation2 + $0x20] sm:$0xff] %v953
    %955 = vst [vmem:[#allocation2 + $0x28] sm:$0xff] %v952
    %956 = vrot.lane.b32.xlu0 %v929, 1
    %v957 = vpop.permute.xlu0 %956
    %958 = vrot.lane.b32.xlu0 %v930, 1
    %v959 = vpop.permute.xlu0 %958
    %v960 = vsel %vm121, %v957, %v959
    %v961 = vsel %vm121, %v959, %v957
    %962 = vst [vmem:[#allocation2 + $0x30] sm:$0xff] %v961
    %963 = vst [vmem:[#allocation2 + $0x38] sm:$0xff] %v960
    %964 = vst [vmem:[#allocation2 + $0x40] sm:$0xff] %v929
    %965 = vst [vmem:[#allocation2 + $0x48] sm:$0xff] %v930
    %966 = vrot.lane.b32.xlu0 %v929, 127
    %v967 = vpop.permute.xlu0 %966
    %968 = vrot.lane.b32.xlu0 %v930, 127
    %v969 = vpop.permute.xlu0 %968
    %v970 = vsel %vm132, %v967, %v969
    %v971 = vsel %vm132, %v969, %v967
    %972 = vst [vmem:[#allocation2 + $0x50] sm:$0xff] %v970
    %973 = vst [vmem:[#allocation2 + $0x58] sm:$0xff] %v971
    %974 = vrot.lane.b32.xlu0 %v929, 113
    %v975 = vpop.permute.xlu0 %974
    %976 = vrot.lane.b32.xlu0 %v930, 113
    %v977 = vpop.permute.xlu0 %976
    %v978 = vsel %vm141, %v975, %v977
    %v979 = vsel %vm141, %v977, %v975
    %980 = vst [vmem:[#allocation2 + $0x60] sm:$0xff] %v978
    %981 = vst [vmem:[#allocation2 + $0x68] sm:$0xff] %v979
    %982 = vrot.lane.b32.xlu0 %v929, 112
    %v983 = vpop.permute.xlu0 %982
    %984 = vrot.lane.b32.xlu0 %v930, 112
    %v985 = vpop.permute.xlu0 %984
    %v986 = vsel %vm150, %v983, %v985
    %v987 = vsel %vm150, %v985, %v983
    %988 = vst [vmem:[#allocation2 + $0x70] sm:$0xff] %v986
    %989 = vst [vmem:[#allocation2 + $0x78] sm:$0xff] %v987
    %990 = vrot.lane.b32.xlu0 %v929, 111
    %v991 = vpop.permute.xlu0 %990
    %992 = vrot.lane.b32.xlu0 %v930, 111
    %v993 = vpop.permute.xlu0 %992
    %v994 = vsel %vm159, %v991, %v993
    %v995 = vsel %vm159, %v993, %v991
    %996 = vst [vmem:[#allocation2 + $0x80] sm:$0xff] %v994
    %997 = vst [vmem:[#allocation2 + $0x88] sm:$0xff] %v995
    %v998 = vld [vmem:[#allocation2] sm:$0xff]
    %v999 = vld [vmem:[#allocation2 + $0x8] sm:$0xff]
    %v1000 = vld [vmem:[#allocation2 + $0x10] sm:$0xff]
    %v1001 = vld [vmem:[#allocation2 + $0x18] sm:$0xff]
    %v1002 = vld [vmem:[#allocation2 + $0x20] sm:$0xff]
    %v1003 = vld [vmem:[#allocation2 + $0x28] sm:$0xff]
    %v1004 = vld [vmem:[#allocation2 + $0x30] sm:$0xff]
    %v1005 = vld [vmem:[#allocation2 + $0x38] sm:$0xff]
    %v1006 = vld [vmem:[#allocation2 + $0x40] sm:$0xff]
    %v1007 = vld [vmem:[#allocation2 + $0x48] sm:$0xff]
    %v1008 = vld [vmem:[#allocation2 + $0x50] sm:$0xff]
    %v1009 = vld [vmem:[#allocation2 + $0x58] sm:$0xff]
    %v1010 = vld [vmem:[#allocation2 + $0x60] sm:$0xff]
    %v1011 = vld [vmem:[#allocation2 + $0x68] sm:$0xff]
    %v1012 = vld [vmem:[#allocation2 + $0x70] sm:$0xff]
    %v1013 = vld [vmem:[#allocation2 + $0x78] sm:$0xff]
    %v1014 = vld [vmem:[#allocation2 + $0x80] sm:$0xff]
    %v1015 = vld [vmem:[#allocation2 + $0x88] sm:$0xff]
    %v1016 = vmul.f32 %v998, %v69
    %v1017 = vmul.f32 %v999, %v70
    %v1018 = vmul.f32 %v1000, %v71
    %v1019 = vmul.f32 %v1001, %v72
    %v1020 = vmul.f32 %v1002, %v73
    %v1021 = vmul.f32 %v1003, %v74
    %v1022 = vmul.f32 %v1004, %v75
    %v1023 = vmul.f32 %v1005, %v76
    %v1024 = vmul.f32 %v1006, %v77
    %v1025 = vmul.f32 %v1007, %v78
    %v1026 = vmul.f32 %v1008, %v79
    %v1027 = vmul.f32 %v1009, %v80
    %v1028 = vmul.f32 %v1010, %v81
    %v1029 = vmul.f32 %v1011, %v82
    %v1030 = vmul.f32 %v1012, %v83
    %v1031 = vmul.f32 %v1013, %v84
    %v1032 = vmul.f32 %v1014, %v85
    %v1033 = vmul.f32 %v1015, %v86
    %1034 = vst [vmem:[#allocation2] sm:$0xff] %v1016
    %1035 = vst [vmem:[#allocation2 + $0x8] sm:$0xff] %v1017
    %1036 = vst [vmem:[#allocation2 + $0x10] sm:$0xff] %v1018
    %1037 = vst [vmem:[#allocation2 + $0x18] sm:$0xff] %v1019
    %1038 = vst [vmem:[#allocation2 + $0x20] sm:$0xff] %v1020
    %1039 = vst [vmem:[#allocation2 + $0x28] sm:$0xff] %v1021
    %1040 = vst [vmem:[#allocation2 + $0x30] sm:$0xff] %v1022
    %1041 = vst [vmem:[#allocation2 + $0x38] sm:$0xff] %v1023
    %1042 = vst [vmem:[#allocation2 + $0x40] sm:$0xff] %v1024
    %1043 = vst [vmem:[#allocation2 + $0x48] sm:$0xff] %v1025
    %1044 = vst [vmem:[#allocation2 + $0x50] sm:$0xff] %v1026
    %1045 = vst [vmem:[#allocation2 + $0x58] sm:$0xff] %v1027
    %1046 = vst [vmem:[#allocation2 + $0x60] sm:$0xff] %v1028
    %1047 = vst [vmem:[#allocation2 + $0x68] sm:$0xff] %v1029
    %1048 = vst [vmem:[#allocation2 + $0x70] sm:$0xff] %v1030
    %1049 = vst [vmem:[#allocation2 + $0x78] sm:$0xff] %v1031
    %1050 = vst [vmem:[#allocation2 + $0x80] sm:$0xff] %v1032
    %1051 = vst [vmem:[#allocation2 + $0x88] sm:$0xff] %v1033
    %v1052 = vld [vmem:[#allocation2] sm:$0xff]
    %v1053 = vld [vmem:[#allocation2 + $0x8] sm:$0xff]
    %v1054 = vld [vmem:[#allocation2 + $0x10] sm:$0xff]
    %v1055 = vld [vmem:[#allocation2 + $0x18] sm:$0xff]
    %v1056 = vld [vmem:[#allocation2 + $0x20] sm:$0xff]
    %v1057 = vld [vmem:[#allocation2 + $0x28] sm:$0xff]
    %v1058 = vld [vmem:[#allocation2 + $0x30] sm:$0xff]
    %v1059 = vld [vmem:[#allocation2 + $0x38] sm:$0xff]
    %v1060 = vld [vmem:[#allocation2 + $0x40] sm:$0xff]
    %v1061 = vld [vmem:[#allocation2 + $0x48] sm:$0xff]
    %v1062 = vld [vmem:[#allocation2 + $0x50] sm:$0xff]
    %v1063 = vld [vmem:[#allocation2 + $0x58] sm:$0xff]
    %v1064 = vld [vmem:[#allocation2 + $0x60] sm:$0xff]
    %v1065 = vld [vmem:[#allocation2 + $0x68] sm:$0xff]
    %v1066 = vld [vmem:[#allocation2 + $0x70] sm:$0xff]
    %v1067 = vld [vmem:[#allocation2 + $0x78] sm:$0xff]
    %v1068 = vld [vmem:[#allocation2 + $0x80] sm:$0xff]
    %v1069 = vld [vmem:[#allocation2 + $0x88] sm:$0xff]
    %v1071 = vsel %vm236, %v931, 0
    %1073 = vmatprep.subr.mxu0 0.0
    %1074 = vmatpush1.msra.mxu0 0.0
    %1075 = vmatprep.subr.mxu0 0.0
    %1076 = vmatpush1.msra.mxu0 0.0
    %1077 = vmatprep.subr.mxu0 0.0
    %1078 = vmatpush1.msra.mxu0 0.0
    %1079 = vmatprep.subr.mxu0 0.0
    %1080 = vmatpush1.msra.mxu0 0.0
    %1081 = vmatprep.subr.mxu0 0.0
    %1082 = vmatpush1.msra.mxu0 0.0
    %1083 = vmatprep.subr.mxu0 0.0
    %1084 = vmatpush1.msra.mxu0 0.0
    %1085 = vmatprep.subr.mxu0 0.0
    %1086 = vmatpush1.msra.mxu0 0.0
    %v1087 = vand.u32 %v1069, 4294901760
    %1088 = vmatprep.subr.mxu0 %v1087
    %v1089 = vand.u32 %v1068, 4294901760
    %1090 = vmatpush1.msra.mxu0 %v1089
    %v1091 = vand.u32 %v1067, 4294901760
    %1092 = vmatprep.subr.mxu0 %v1091
    %v1093 = vand.u32 %v1066, 4294901760
    %1094 = vmatpush1.msra.mxu0 %v1093
    %v1095 = vand.u32 %v1065, 4294901760
    %1096 = vmatprep.subr.mxu0 %v1095
    %v1097 = vand.u32 %v1064, 4294901760
    %1098 = vmatpush1.msra.mxu0 %v1097
    %v1099 = vand.u32 %v1063, 4294901760
    %1100 = vmatprep.subr.mxu0 %v1099
    %v1101 = vand.u32 %v1062, 4294901760
    %1102 = vmatpush1.msra.mxu0 %v1101
    %v1103 = vand.u32 %v1061, 4294901760
    %1104 = vmatprep.subr.mxu0 %v1103
    %v1105 = vand.u32 %v1060, 4294901760
    %1106 = vmatpush1.msra.mxu0 %v1105
    %v1107 = vand.u32 %v1059, 4294901760
    %1108 = vmatprep.subr.mxu0 %v1107
    %v1109 = vand.u32 %v1058, 4294901760
    %1110 = vmatpush1.msra.mxu0 %v1109
    %v1111 = vand.u32 %v1057, 4294901760
    %1112 = vmatprep.subr.mxu0 %v1111
    %v1113 = vand.u32 %v1056, 4294901760
    %1114 = vmatpush1.msra.mxu0 %v1113
    %v1115 = vand.u32 %v1055, 4294901760
    %1116 = vmatprep.subr.mxu0 %v1115
    %v1117 = vand.u32 %v1054, 4294901760
    %1118 = vmatpush1.msra.mxu0 %v1117
    %v1119 = vand.u32 %v1053, 4294901760
    %1120 = vmatprep.subr.mxu0 %v1119
    %v1121 = vand.u32 %v1052, 4294901760
    %1122 = vmatpush1.msra.mxu0 %v1121
    %1123 = vmatprep.subr.mxu0 0.0
    %1124 = vmatpush2.msra.mxu0 0.0
    %1125 = vmatprep.subr.mxu0 0.0
    %1126 = vmatpush2.msra.mxu0 0.0
    %1127 = vmatprep.subr.mxu0 0.0
    %1128 = vmatpush2.msra.mxu0 0.0
    %1129 = vmatprep.subr.mxu0 0.0
    %1130 = vmatpush2.msra.mxu0 0.0
    %1131 = vmatprep.subr.mxu0 0.0
    %1132 = vmatpush2.msra.mxu0 0.0
    %1133 = vmatprep.subr.mxu0 0.0
    %1134 = vmatpush2.msra.mxu0 0.0
    %1135 = vmatprep.subr.mxu0 0.0
    %1136 = vmatpush2.msra.mxu0 0.0
    %1137 = vmatprep.subr.mxu0 0.0
    %1138 = vmatpush2.msra.mxu0 0.0
    %1139 = vmatprep.subr.mxu0 0.0
    %1140 = vmatpush2.msra.mxu0 0.0
    %1141 = vmatprep.subr.mxu0 0.0
    %1142 = vmatpush2.msra.mxu0 0.0
    %1143 = vmatprep.subr.mxu0 0.0
    %1144 = vmatpush2.msra.mxu0 0.0
    %1145 = vmatprep.subr.mxu0 0.0
    %1146 = vmatpush2.msra.mxu0 0.0
    %1147 = vmatprep.subr.mxu0 0.0
    %1148 = vmatpush2.msra.mxu0 0.0
    %1149 = vmatprep.subr.mxu0 0.0
    %1150 = vmatpush2.msra.mxu0 0.0
    %1151 = vmatprep.subr.mxu0 0.0
    %1152 = vmatpush2.msra.mxu0 0.0
    %1153 = vmatprep.subr.mxu0 0.0
    %1154 = vmatpush2.msra.mxu0 0.0
    %1155 = vmatprep.mubr.f32.mxu0 0.0
    %v1156 = vand.u32 %v1071, 4294901760
    %v1157 = vsub.f32 %v1071, %v1156
    %v1158 = vand.u32 %v1157, 4294901760
    %v1159 = vsub.f32 %v1157, %v1158
    %v1160 = vand.u32 %v1159, 4294901760
    %1161 = vmatmul.mubr.f32.gmra.mxu0 %v1160
    %v1162 = vpop.f32.mrf.mxu0
    %v1163 = vadd.f32 0.0, %v1162
    %v1164 = vpop.f32.mrf.mxu0
    %v1165 = vadd.f32 0.0, %v1164
    %1166 = vdwg.mxu0
    %1167 = vmatprep.subr.mxu0 0.0
    %1168 = vmatpush1.msra.mxu0 0.0
    %1169 = vmatprep.subr.mxu0 0.0
    %1170 = vmatpush1.msra.mxu0 0.0
    %1171 = vmatprep.subr.mxu0 0.0
    %1172 = vmatpush1.msra.mxu0 0.0
    %1173 = vmatprep.subr.mxu0 0.0
    %1174 = vmatpush1.msra.mxu0 0.0
    %1175 = vmatprep.subr.mxu0 0.0
    %1176 = vmatpush1.msra.mxu0 0.0
    %1177 = vmatprep.subr.mxu0 0.0
    %1178 = vmatpush1.msra.mxu0 0.0
    %1179 = vmatprep.subr.mxu0 0.0
    %1180 = vmatpush1.msra.mxu0 0.0
    %v1181 = vand.u32 %v1069, 4294901760
    %v1182 = vsub.f32 %v1069, %v1181
    %v1183 = vand.u32 %v1182, 4294901760
    %v1184 = vsub.f32 %v1182, %v1183
    %v1185 = vand.u32 %v1184, 4294901760
    %1186 = vmatprep.subr.mxu0 %v1185
    %v1187 = vand.u32 %v1068, 4294901760
    %v1188 = vsub.f32 %v1068, %v1187
    %v1189 = vand.u32 %v1188, 4294901760
    %v1190 = vsub.f32 %v1188, %v1189
    %v1191 = vand.u32 %v1190, 4294901760
    %1192 = vmatpush1.msra.mxu0 %v1191
    %v1193 = vand.u32 %v1067, 4294901760
    %v1194 = vsub.f32 %v1067, %v1193
    %v1195 = vand.u32 %v1194, 4294901760
    %v1196 = vsub.f32 %v1194, %v1195
    %v1197 = vand.u32 %v1196, 4294901760
    %1198 = vmatprep.subr.mxu0 %v1197
    %v1199 = vand.u32 %v1066, 4294901760
    %v1200 = vsub.f32 %v1066, %v1199
    %v1201 = vand.u32 %v1200, 4294901760
    %v1202 = vsub.f32 %v1200, %v1201
    %v1203 = vand.u32 %v1202, 4294901760
    %1204 = vmatpush1.msra.mxu0 %v1203
    %v1205 = vand.u32 %v1065, 4294901760
    %v1206 = vsub.f32 %v1065, %v1205
    %v1207 = vand.u32 %v1206, 4294901760
    %v1208 = vsub.f32 %v1206, %v1207
    %v1209 = vand.u32 %v1208, 4294901760
    %1210 = vmatprep.subr.mxu0 %v1209
    %v1211 = vand.u32 %v1064, 4294901760
    %v1212 = vsub.f32 %v1064, %v1211
    %v1213 = vand.u32 %v1212, 4294901760
    %v1214 = vsub.f32 %v1212, %v1213
    %v1215 = vand.u32 %v1214, 4294901760
    %1216 = vmatpush1.msra.mxu0 %v1215
    %v1217 = vand.u32 %v1063, 4294901760
    %v1218 = vsub.f32 %v1063, %v1217
    %v1219 = vand.u32 %v1218, 4294901760
    %v1220 = vsub.f32 %v1218, %v1219
    %v1221 = vand.u32 %v1220, 4294901760
    %1222 = vmatprep.subr.mxu0 %v1221
    %v1223 = vand.u32 %v1062, 4294901760
    %v1224 = vsub.f32 %v1062, %v1223
    %v1225 = vand.u32 %v1224, 4294901760
    %v1226 = vsub.f32 %v1224, %v1225
    %v1227 = vand.u32 %v1226, 4294901760
    %1228 = vmatpush1.msra.mxu0 %v1227
    %v1229 = vand.u32 %v1061, 4294901760
    %v1230 = vsub.f32 %v1061, %v1229
    %v1231 = vand.u32 %v1230, 4294901760
    %v1232 = vsub.f32 %v1230, %v1231
    %v1233 = vand.u32 %v1232, 4294901760
    %1234 = vmatprep.subr.mxu0 %v1233
    %v1235 = vand.u32 %v1060, 4294901760
    %v1236 = vsub.f32 %v1060, %v1235
    %v1237 = vand.u32 %v1236, 4294901760
    %v1238 = vsub.f32 %v1236, %v1237
    %v1239 = vand.u32 %v1238, 4294901760
    %1240 = vmatpush1.msra.mxu0 %v1239
    %v1241 = vand.u32 %v1059, 4294901760
    %v1242 = vsub.f32 %v1059, %v1241
    %v1243 = vand.u32 %v1242, 4294901760
    %v1244 = vsub.f32 %v1242, %v1243
    %v1245 = vand.u32 %v1244, 4294901760
    %1246 = vmatprep.subr.mxu0 %v1245
    %v1247 = vand.u32 %v1058, 4294901760
    %v1248 = vsub.f32 %v1058, %v1247
    %v1249 = vand.u32 %v1248, 4294901760
    %v1250 = vsub.f32 %v1248, %v1249
    %v1251 = vand.u32 %v1250, 4294901760
    %1252 = vmatpush1.msra.mxu0 %v1251
    %v1253 = vand.u32 %v1057, 4294901760
    %v1254 = vsub.f32 %v1057, %v1253
    %v1255 = vand.u32 %v1254, 4294901760
    %v1256 = vsub.f32 %v1254, %v1255
    %v1257 = vand.u32 %v1256, 4294901760
    %1258 = vmatprep.subr.mxu0 %v1257
    %v1259 = vand.u32 %v1056, 4294901760
    %v1260 = vsub.f32 %v1056, %v1259
    %v1261 = vand.u32 %v1260, 4294901760
    %v1262 = vsub.f32 %v1260, %v1261
    %v1263 = vand.u32 %v1262, 4294901760
    %1264 = vmatpush1.msra.mxu0 %v1263
    %v1265 = vand.u32 %v1055, 4294901760
    %v1266 = vsub.f32 %v1055, %v1265
    %v1267 = vand.u32 %v1266, 4294901760
    %v1268 = vsub.f32 %v1266, %v1267
    %v1269 = vand.u32 %v1268, 4294901760
    %1270 = vmatprep.subr.mxu0 %v1269
    %v1271 = vand.u32 %v1054, 4294901760
    %v1272 = vsub.f32 %v1054, %v1271
    %v1273 = vand.u32 %v1272, 4294901760
    %v1274 = vsub.f32 %v1272, %v1273
    %v1275 = vand.u32 %v1274, 4294901760
    %1276 = vmatpush1.msra.mxu0 %v1275
    %v1277 = vand.u32 %v1053, 4294901760
    %v1278 = vsub.f32 %v1053, %v1277
    %v1279 = vand.u32 %v1278, 4294901760
    %v1280 = vsub.f32 %v1278, %v1279
    %v1281 = vand.u32 %v1280, 4294901760
    %1282 = vmatprep.subr.mxu0 %v1281
    %v1283 = vand.u32 %v1052, 4294901760
    %v1284 = vsub.f32 %v1052, %v1283
    %v1285 = vand.u32 %v1284, 4294901760
    %v1286 = vsub.f32 %v1284, %v1285
    %v1287 = vand.u32 %v1286, 4294901760
    %1288 = vmatpush1.msra.mxu0 %v1287
    %1289 = vmatprep.subr.mxu0 0.0
    %1290 = vmatpush2.msra.mxu0 0.0
    %1291 = vmatprep.subr.mxu0 0.0
    %1292 = vmatpush2.msra.mxu0 0.0
    %1293 = vmatprep.subr.mxu0 0.0
    %1294 = vmatpush2.msra.mxu0 0.0
    %1295 = vmatprep.subr.mxu0 0.0
    %1296 = vmatpush2.msra.mxu0 0.0
    %1297 = vmatprep.subr.mxu0 0.0
    %1298 = vmatpush2.msra.mxu0 0.0
    %1299 = vmatprep.subr.mxu0 0.0
    %1300 = vmatpush2.msra.mxu0 0.0
    %1301 = vmatprep.subr.mxu0 0.0
    %1302 = vmatpush2.msra.mxu0 0.0
    %1303 = vmatprep.subr.mxu0 0.0
    %1304 = vmatpush2.msra.mxu0 0.0
    %1305 = vmatprep.subr.mxu0 0.0
    %1306 = vmatpush2.msra.mxu0 0.0
    %1307 = vmatprep.subr.mxu0 0.0
    %1308 = vmatpush2.msra.mxu0 0.0
    %1309 = vmatprep.subr.mxu0 0.0
    %1310 = vmatpush2.msra.mxu0 0.0
    %1311 = vmatprep.subr.mxu0 0.0
    %1312 = vmatpush2.msra.mxu0 0.0
    %1313 = vmatprep.subr.mxu0 0.0
    %1314 = vmatpush2.msra.mxu0 0.0
    %1315 = vmatprep.subr.mxu0 0.0
    %1316 = vmatpush2.msra.mxu0 0.0
    %1317 = vmatprep.subr.mxu0 0.0
    %1318 = vmatpush2.msra.mxu0 0.0
    %1319 = vmatprep.subr.mxu0 0.0
    %1320 = vmatpush2.msra.mxu0 0.0
    %1321 = vmatprep.mubr.f32.mxu0 0.0
    %v1322 = vand.u32 %v1071, 4294901760
    %1323 = vmatmul.mubr.f32.gmra.mxu0 %v1322
    %v1324 = vpop.f32.mrf.mxu0
    %v1325 = vadd.f32 %v1163, %v1324
    %v1326 = vpop.f32.mrf.mxu0
    %v1327 = vadd.f32 %v1165, %v1326
    %1328 = vdwg.mxu0
    %1329 = vmatprep.subr.mxu0 0.0
    %1330 = vmatpush1.msra.mxu0 0.0
    %1331 = vmatprep.subr.mxu0 0.0
    %1332 = vmatpush1.msra.mxu0 0.0
    %1333 = vmatprep.subr.mxu0 0.0
    %1334 = vmatpush1.msra.mxu0 0.0
    %1335 = vmatprep.subr.mxu0 0.0
    %1336 = vmatpush1.msra.mxu0 0.0
    %1337 = vmatprep.subr.mxu0 0.0
    %1338 = vmatpush1.msra.mxu0 0.0
    %1339 = vmatprep.subr.mxu0 0.0
    %1340 = vmatpush1.msra.mxu0 0.0
    %1341 = vmatprep.subr.mxu0 0.0
    %1342 = vmatpush1.msra.mxu0 0.0
    %v1343 = vand.u32 %v1069, 4294901760
    %v1344 = vsub.f32 %v1069, %v1343
    %1345 = vmatprep.subr.mxu0 %v1344
    %v1346 = vand.u32 %v1068, 4294901760
    %v1347 = vsub.f32 %v1068, %v1346
    %1348 = vmatpush1.msra.mxu0 %v1347
    %v1349 = vand.u32 %v1067, 4294901760
    %v1350 = vsub.f32 %v1067, %v1349
    %1351 = vmatprep.subr.mxu0 %v1350
    %v1352 = vand.u32 %v1066, 4294901760
    %v1353 = vsub.f32 %v1066, %v1352
    %1354 = vmatpush1.msra.mxu0 %v1353
    %v1355 = vand.u32 %v1065, 4294901760
    %v1356 = vsub.f32 %v1065, %v1355
    %1357 = vmatprep.subr.mxu0 %v1356
    %v1358 = vand.u32 %v1064, 4294901760
    %v1359 = vsub.f32 %v1064, %v1358
    %1360 = vmatpush1.msra.mxu0 %v1359
    %v1361 = vand.u32 %v1063, 4294901760
    %v1362 = vsub.f32 %v1063, %v1361
    %1363 = vmatprep.subr.mxu0 %v1362
    %v1364 = vand.u32 %v1062, 4294901760
    %v1365 = vsub.f32 %v1062, %v1364
    %1366 = vmatpush1.msra.mxu0 %v1365
    %v1367 = vand.u32 %v1061, 4294901760
    %v1368 = vsub.f32 %v1061, %v1367
    %1369 = vmatprep.subr.mxu0 %v1368
    %v1370 = vand.u32 %v1060, 4294901760
    %v1371 = vsub.f32 %v1060, %v1370
    %1372 = vmatpush1.msra.mxu0 %v1371
    %v1373 = vand.u32 %v1059, 4294901760
    %v1374 = vsub.f32 %v1059, %v1373
    %1375 = vmatprep.subr.mxu0 %v1374
    %v1376 = vand.u32 %v1058, 4294901760
    %v1377 = vsub.f32 %v1058, %v1376
    %1378 = vmatpush1.msra.mxu0 %v1377
    %v1379 = vand.u32 %v1057, 4294901760
    %v1380 = vsub.f32 %v1057, %v1379
    %1381 = vmatprep.subr.mxu0 %v1380
    %v1382 = vand.u32 %v1056, 4294901760
    %v1383 = vsub.f32 %v1056, %v1382
    %1384 = vmatpush1.msra.mxu0 %v1383
    %v1385 = vand.u32 %v1055, 4294901760
    %v1386 = vsub.f32 %v1055, %v1385
    %1387 = vmatprep.subr.mxu0 %v1386
    %v1388 = vand.u32 %v1054, 4294901760
    %v1389 = vsub.f32 %v1054, %v1388
    %1390 = vmatpush1.msra.mxu0 %v1389
    %v1391 = vand.u32 %v1053, 4294901760
    %v1392 = vsub.f32 %v1053, %v1391
    %1393 = vmatprep.subr.mxu0 %v1392
    %v1394 = vand.u32 %v1052, 4294901760
    %v1395 = vsub.f32 %v1052, %v1394
    %1396 = vmatpush1.msra.mxu0 %v1395
    %1397 = vmatprep.subr.mxu0 0.0
    %1398 = vmatpush2.msra.mxu0 0.0
    %1399 = vmatprep.subr.mxu0 0.0
    %1400 = vmatpush2.msra.mxu0 0.0
    %1401 = vmatprep.subr.mxu0 0.0
    %1402 = vmatpush2.msra.mxu0 0.0
    %1403 = vmatprep.subr.mxu0 0.0
    %1404 = vmatpush2.msra.mxu0 0.0
    %1405 = vmatprep.subr.mxu0 0.0
    %1406 = vmatpush2.msra.mxu0 0.0
    %1407 = vmatprep.subr.mxu0 0.0
    %1408 = vmatpush2.msra.mxu0 0.0
    %1409 = vmatprep.subr.mxu0 0.0
    %1410 = vmatpush2.msra.mxu0 0.0
    %1411 = vmatprep.subr.mxu0 0.0
    %1412 = vmatpush2.msra.mxu0 0.0
    %1413 = vmatprep.subr.mxu0 0.0
    %1414 = vmatpush2.msra.mxu0 0.0
    %1415 = vmatprep.subr.mxu0 0.0
    %1416 = vmatpush2.msra.mxu0 0.0
    %1417 = vmatprep.subr.mxu0 0.0
    %1418 = vmatpush2.msra.mxu0 0.0
    %1419 = vmatprep.subr.mxu0 0.0
    %1420 = vmatpush2.msra.mxu0 0.0
    %1421 = vmatprep.subr.mxu0 0.0
    %1422 = vmatpush2.msra.mxu0 0.0
    %1423 = vmatprep.subr.mxu0 0.0
    %1424 = vmatpush2.msra.mxu0 0.0
    %1425 = vmatprep.subr.mxu0 0.0
    %1426 = vmatpush2.msra.mxu0 0.0
    %1427 = vmatprep.subr.mxu0 0.0
    %1428 = vmatpush2.msra.mxu0 0.0
    %1429 = vmatprep.mubr.f32.mxu0 0.0
    %v1430 = vand.u32 %v1071, 4294901760
    %v1431 = vsub.f32 %v1071, %v1430
    %1432 = vmatmul.mubr.f32.gmra.mxu0 %v1431
    %v1433 = vpop.f32.mrf.mxu0
    %v1434 = vadd.f32 %v1325, %v1433
    %v1435 = vpop.f32.mrf.mxu0
    %v1436 = vadd.f32 %v1327, %v1435
    %1437 = vdwg.mxu0
    %1438 = vmatprep.subr.mxu0 0.0
    %1439 = vmatpush1.msra.mxu0 0.0
    %1440 = vmatprep.subr.mxu0 0.0
    %1441 = vmatpush1.msra.mxu0 0.0
    %1442 = vmatprep.subr.mxu0 0.0
    %1443 = vmatpush1.msra.mxu0 0.0
    %1444 = vmatprep.subr.mxu0 0.0
    %1445 = vmatpush1.msra.mxu0 0.0
    %1446 = vmatprep.subr.mxu0 0.0
    %1447 = vmatpush1.msra.mxu0 0.0
    %1448 = vmatprep.subr.mxu0 0.0
    %1449 = vmatpush1.msra.mxu0 0.0
    %1450 = vmatprep.subr.mxu0 0.0
    %1451 = vmatpush1.msra.mxu0 0.0
    %v1452 = vand.u32 %v1069, 4294901760
    %1453 = vmatprep.subr.mxu0 %v1452
    %v1454 = vand.u32 %v1068, 4294901760
    %1455 = vmatpush1.msra.mxu0 %v1454
    %v1456 = vand.u32 %v1067, 4294901760
    %1457 = vmatprep.subr.mxu0 %v1456
    %v1458 = vand.u32 %v1066, 4294901760
    %1459 = vmatpush1.msra.mxu0 %v1458
    %v1460 = vand.u32 %v1065, 4294901760
    %1461 = vmatprep.subr.mxu0 %v1460
    %v1462 = vand.u32 %v1064, 4294901760
    %1463 = vmatpush1.msra.mxu0 %v1462
    %v1464 = vand.u32 %v1063, 4294901760
    %1465 = vmatprep.subr.mxu0 %v1464
    %v1466 = vand.u32 %v1062, 4294901760
    %1467 = vmatpush1.msra.mxu0 %v1466
    %v1468 = vand.u32 %v1061, 4294901760
    %1469 = vmatprep.subr.mxu0 %v1468
    %v1470 = vand.u32 %v1060, 4294901760
    %1471 = vmatpush1.msra.mxu0 %v1470
    %v1472 = vand.u32 %v1059, 4294901760
    %1473 = vmatprep.subr.mxu0 %v1472
    %v1474 = vand.u32 %v1058, 4294901760
    %1475 = vmatpush1.msra.mxu0 %v1474
    %v1476 = vand.u32 %v1057, 4294901760
    %1477 = vmatprep.subr.mxu0 %v1476
    %v1478 = vand.u32 %v1056, 4294901760
    %1479 = vmatpush1.msra.mxu0 %v1478
    %v1480 = vand.u32 %v1055, 4294901760
    %1481 = vmatprep.subr.mxu0 %v1480
    %v1482 = vand.u32 %v1054, 4294901760
    %1483 = vmatpush1.msra.mxu0 %v1482
    %v1484 = vand.u32 %v1053, 4294901760
    %1485 = vmatprep.subr.mxu0 %v1484
    %v1486 = vand.u32 %v1052, 4294901760
    %1487 = vmatpush1.msra.mxu0 %v1486
    %1488 = vmatprep.subr.mxu0 0.0
    %1489 = vmatpush2.msra.mxu0 0.0
    %1490 = vmatprep.subr.mxu0 0.0
    %1491 = vmatpush2.msra.mxu0 0.0
    %1492 = vmatprep.subr.mxu0 0.0
    %1493 = vmatpush2.msra.mxu0 0.0
    %1494 = vmatprep.subr.mxu0 0.0
    %1495 = vmatpush2.msra.mxu0 0.0
    %1496 = vmatprep.subr.mxu0 0.0
    %1497 = vmatpush2.msra.mxu0 0.0
    %1498 = vmatprep.subr.mxu0 0.0
    %1499 = vmatpush2.msra.mxu0 0.0
    %1500 = vmatprep.subr.mxu0 0.0
    %1501 = vmatpush2.msra.mxu0 0.0
    %1502 = vmatprep.subr.mxu0 0.0
    %1503 = vmatpush2.msra.mxu0 0.0
    %1504 = vmatprep.subr.mxu0 0.0
    %1505 = vmatpush2.msra.mxu0 0.0
    %1506 = vmatprep.subr.mxu0 0.0
    %1507 = vmatpush2.msra.mxu0 0.0
    %1508 = vmatprep.subr.mxu0 0.0
    %1509 = vmatpush2.msra.mxu0 0.0
    %1510 = vmatprep.subr.mxu0 0.0
    %1511 = vmatpush2.msra.mxu0 0.0
    %1512 = vmatprep.subr.mxu0 0.0
    %1513 = vmatpush2.msra.mxu0 0.0
    %1514 = vmatprep.subr.mxu0 0.0
    %1515 = vmatpush2.msra.mxu0 0.0
    %1516 = vmatprep.subr.mxu0 0.0
    %1517 = vmatpush2.msra.mxu0 0.0
    %1518 = vmatprep.subr.mxu0 0.0
    %1519 = vmatpush2.msra.mxu0 0.0
    %1520 = vmatprep.mubr.f32.mxu0 0.0
    %v1521 = vand.u32 %v1071, 4294901760
    %v1522 = vsub.f32 %v1071, %v1521
    %v1523 = vand.u32 %v1522, 4294901760
    %1524 = vmatmul.mubr.f32.gmra.mxu0 %v1523
    %v1525 = vpop.f32.mrf.mxu0
    %v1526 = vadd.f32 %v1434, %v1525
    %v1527 = vpop.f32.mrf.mxu0
    %v1528 = vadd.f32 %v1436, %v1527
    %1529 = vdwg.mxu0
    %1530 = vmatprep.subr.mxu0 0.0
    %1531 = vmatpush1.msra.mxu0 0.0
    %1532 = vmatprep.subr.mxu0 0.0
    %1533 = vmatpush1.msra.mxu0 0.0
    %1534 = vmatprep.subr.mxu0 0.0
    %1535 = vmatpush1.msra.mxu0 0.0
    %1536 = vmatprep.subr.mxu0 0.0
    %1537 = vmatpush1.msra.mxu0 0.0
    %1538 = vmatprep.subr.mxu0 0.0
    %1539 = vmatpush1.msra.mxu0 0.0
    %1540 = vmatprep.subr.mxu0 0.0
    %1541 = vmatpush1.msra.mxu0 0.0
    %1542 = vmatprep.subr.mxu0 0.0
    %1543 = vmatpush1.msra.mxu0 0.0
    %v1544 = vand.u32 %v1069, 4294901760
    %v1545 = vsub.f32 %v1069, %v1544
    %v1546 = vand.u32 %v1545, 4294901760
    %1547 = vmatprep.subr.mxu0 %v1546
    %v1548 = vand.u32 %v1068, 4294901760
    %v1549 = vsub.f32 %v1068, %v1548
    %v1550 = vand.u32 %v1549, 4294901760
    %1551 = vmatpush1.msra.mxu0 %v1550
    %v1552 = vand.u32 %v1067, 4294901760
    %v1553 = vsub.f32 %v1067, %v1552
    %v1554 = vand.u32 %v1553, 4294901760
    %1555 = vmatprep.subr.mxu0 %v1554
    %v1556 = vand.u32 %v1066, 4294901760
    %v1557 = vsub.f32 %v1066, %v1556
    %v1558 = vand.u32 %v1557, 4294901760
    %1559 = vmatpush1.msra.mxu0 %v1558
    %v1560 = vand.u32 %v1065, 4294901760
    %v1561 = vsub.f32 %v1065, %v1560
    %v1562 = vand.u32 %v1561, 4294901760
    %1563 = vmatprep.subr.mxu0 %v1562
    %v1564 = vand.u32 %v1064, 4294901760
    %v1565 = vsub.f32 %v1064, %v1564
    %v1566 = vand.u32 %v1565, 4294901760
    %1567 = vmatpush1.msra.mxu0 %v1566
    %v1568 = vand.u32 %v1063, 4294901760
    %v1569 = vsub.f32 %v1063, %v1568
    %v1570 = vand.u32 %v1569, 4294901760
    %1571 = vmatprep.subr.mxu0 %v1570
    %v1572 = vand.u32 %v1062, 4294901760
    %v1573 = vsub.f32 %v1062, %v1572
    %v1574 = vand.u32 %v1573, 4294901760
    %1575 = vmatpush1.msra.mxu0 %v1574
    %v1576 = vand.u32 %v1061, 4294901760
    %v1577 = vsub.f32 %v1061, %v1576
    %v1578 = vand.u32 %v1577, 4294901760
    %1579 = vmatprep.subr.mxu0 %v1578
    %v1580 = vand.u32 %v1060, 4294901760
    %v1581 = vsub.f32 %v1060, %v1580
    %v1582 = vand.u32 %v1581, 4294901760
    %1583 = vmatpush1.msra.mxu0 %v1582
    %v1584 = vand.u32 %v1059, 4294901760
    %v1585 = vsub.f32 %v1059, %v1584
    %v1586 = vand.u32 %v1585, 4294901760
    %1587 = vmatprep.subr.mxu0 %v1586
    %v1588 = vand.u32 %v1058, 4294901760
    %v1589 = vsub.f32 %v1058, %v1588
    %v1590 = vand.u32 %v1589, 4294901760
    %1591 = vmatpush1.msra.mxu0 %v1590
    %v1592 = vand.u32 %v1057, 4294901760
    %v1593 = vsub.f32 %v1057, %v1592
    %v1594 = vand.u32 %v1593, 4294901760
    %1595 = vmatprep.subr.mxu0 %v1594
    %v1596 = vand.u32 %v1056, 4294901760
    %v1597 = vsub.f32 %v1056, %v1596
    %v1598 = vand.u32 %v1597, 4294901760
    %1599 = vmatpush1.msra.mxu0 %v1598
    %v1600 = vand.u32 %v1055, 4294901760
    %v1601 = vsub.f32 %v1055, %v1600
    %v1602 = vand.u32 %v1601, 4294901760
    %1603 = vmatprep.subr.mxu0 %v1602
    %v1604 = vand.u32 %v1054, 4294901760
    %v1605 = vsub.f32 %v1054, %v1604
    %v1606 = vand.u32 %v1605, 4294901760
    %1607 = vmatpush1.msra.mxu0 %v1606
    %v1608 = vand.u32 %v1053, 4294901760
    %v1609 = vsub.f32 %v1053, %v1608
    %v1610 = vand.u32 %v1609, 4294901760
    %1611 = vmatprep.subr.mxu0 %v1610
    %v1612 = vand.u32 %v1052, 4294901760
    %v1613 = vsub.f32 %v1052, %v1612
    %v1614 = vand.u32 %v1613, 4294901760
    %1615 = vmatpush1.msra.mxu0 %v1614
    %1616 = vmatprep.subr.mxu0 0.0
    %1617 = vmatpush2.msra.mxu0 0.0
    %1618 = vmatprep.subr.mxu0 0.0
    %1619 = vmatpush2.msra.mxu0 0.0
    %1620 = vmatprep.subr.mxu0 0.0
    %1621 = vmatpush2.msra.mxu0 0.0
    %1622 = vmatprep.subr.mxu0 0.0
    %1623 = vmatpush2.msra.mxu0 0.0
    %1624 = vmatprep.subr.mxu0 0.0
    %1625 = vmatpush2.msra.mxu0 0.0
    %1626 = vmatprep.subr.mxu0 0.0
    %1627 = vmatpush2.msra.mxu0 0.0
    %1628 = vmatprep.subr.mxu0 0.0
    %1629 = vmatpush2.msra.mxu0 0.0
    %1630 = vmatprep.subr.mxu0 0.0
    %1631 = vmatpush2.msra.mxu0 0.0
    %1632 = vmatprep.subr.mxu0 0.0
    %1633 = vmatpush2.msra.mxu0 0.0
    %1634 = vmatprep.subr.mxu0 0.0
    %1635 = vmatpush2.msra.mxu0 0.0
    %1636 = vmatprep.subr.mxu0 0.0
    %1637 = vmatpush2.msra.mxu0 0.0
    %1638 = vmatprep.subr.mxu0 0.0
    %1639 = vmatpush2.msra.mxu0 0.0
    %1640 = vmatprep.subr.mxu0 0.0
    %1641 = vmatpush2.msra.mxu0 0.0
    %1642 = vmatprep.subr.mxu0 0.0
    %1643 = vmatpush2.msra.mxu0 0.0
    %1644 = vmatprep.subr.mxu0 0.0
    %1645 = vmatpush2.msra.mxu0 0.0
    %1646 = vmatprep.subr.mxu0 0.0
    %1647 = vmatpush2.msra.mxu0 0.0
    %1648 = vmatprep.mubr.f32.mxu0 0.0
    %v1649 = vand.u32 %v1071, 4294901760
    %1650 = vmatmul.mubr.f32.gmra.mxu0 %v1649
    %v1651 = vpop.f32.mrf.mxu0
    %v1652 = vadd.f32 %v1526, %v1651
    %v1653 = vpop.f32.mrf.mxu0
    %v1654 = vadd.f32 %v1528, %v1653
    %1655 = vdwg.mxu0
    %1656 = vmatprep.subr.mxu0 0.0
    %1657 = vmatpush1.msra.mxu0 0.0
    %1658 = vmatprep.subr.mxu0 0.0
    %1659 = vmatpush1.msra.mxu0 0.0
    %1660 = vmatprep.subr.mxu0 0.0
    %1661 = vmatpush1.msra.mxu0 0.0
    %1662 = vmatprep.subr.mxu0 0.0
    %1663 = vmatpush1.msra.mxu0 0.0
    %1664 = vmatprep.subr.mxu0 0.0
    %1665 = vmatpush1.msra.mxu0 0.0
    %1666 = vmatprep.subr.mxu0 0.0
    %1667 = vmatpush1.msra.mxu0 0.0
    %1668 = vmatprep.subr.mxu0 0.0
    %1669 = vmatpush1.msra.mxu0 0.0
    %v1670 = vand.u32 %v1069, 4294901760
    %1671 = vmatprep.subr.mxu0 %v1670
    %v1672 = vand.u32 %v1068, 4294901760
    %1673 = vmatpush1.msra.mxu0 %v1672
    %v1674 = vand.u32 %v1067, 4294901760
    %1675 = vmatprep.subr.mxu0 %v1674
    %v1676 = vand.u32 %v1066, 4294901760
    %1677 = vmatpush1.msra.mxu0 %v1676
    %v1678 = vand.u32 %v1065, 4294901760
    %1679 = vmatprep.subr.mxu0 %v1678
    %v1680 = vand.u32 %v1064, 4294901760
    %1681 = vmatpush1.msra.mxu0 %v1680
    %v1682 = vand.u32 %v1063, 4294901760
    %1683 = vmatprep.subr.mxu0 %v1682
    %v1684 = vand.u32 %v1062, 4294901760
    %1685 = vmatpush1.msra.mxu0 %v1684
    %v1686 = vand.u32 %v1061, 4294901760
    %1687 = vmatprep.subr.mxu0 %v1686
    %v1688 = vand.u32 %v1060, 4294901760
    %1689 = vmatpush1.msra.mxu0 %v1688
    %v1690 = vand.u32 %v1059, 4294901760
    %1691 = vmatprep.subr.mxu0 %v1690
    %v1692 = vand.u32 %v1058, 4294901760
    %1693 = vmatpush1.msra.mxu0 %v1692
    %v1694 = vand.u32 %v1057, 4294901760
    %1695 = vmatprep.subr.mxu0 %v1694
    %v1696 = vand.u32 %v1056, 4294901760
    %1697 = vmatpush1.msra.mxu0 %v1696
    %v1698 = vand.u32 %v1055, 4294901760
    %1699 = vmatprep.subr.mxu0 %v1698
    %v1700 = vand.u32 %v1054, 4294901760
    %1701 = vmatpush1.msra.mxu0 %v1700
    %v1702 = vand.u32 %v1053, 4294901760
    %1703 = vmatprep.subr.mxu0 %v1702
    %v1704 = vand.u32 %v1052, 4294901760
    %1705 = vmatpush1.msra.mxu0 %v1704
    %1706 = vmatprep.subr.mxu0 0.0
    %1707 = vmatpush2.msra.mxu0 0.0
    %1708 = vmatprep.subr.mxu0 0.0
    %1709 = vmatpush2.msra.mxu0 0.0
    %1710 = vmatprep.subr.mxu0 0.0
    %1711 = vmatpush2.msra.mxu0 0.0
    %1712 = vmatprep.subr.mxu0 0.0
    %1713 = vmatpush2.msra.mxu0 0.0
    %1714 = vmatprep.subr.mxu0 0.0
    %1715 = vmatpush2.msra.mxu0 0.0
    %1716 = vmatprep.subr.mxu0 0.0
    %1717 = vmatpush2.msra.mxu0 0.0
    %1718 = vmatprep.subr.mxu0 0.0
    %1719 = vmatpush2.msra.mxu0 0.0
    %1720 = vmatprep.subr.mxu0 0.0
    %1721 = vmatpush2.msra.mxu0 0.0
    %1722 = vmatprep.subr.mxu0 0.0
    %1723 = vmatpush2.msra.mxu0 0.0
    %1724 = vmatprep.subr.mxu0 0.0
    %1725 = vmatpush2.msra.mxu0 0.0
    %1726 = vmatprep.subr.mxu0 0.0
    %1727 = vmatpush2.msra.mxu0 0.0
    %1728 = vmatprep.subr.mxu0 0.0
    %1729 = vmatpush2.msra.mxu0 0.0
    %1730 = vmatprep.subr.mxu0 0.0
    %1731 = vmatpush2.msra.mxu0 0.0
    %1732 = vmatprep.subr.mxu0 0.0
    %1733 = vmatpush2.msra.mxu0 0.0
    %1734 = vmatprep.subr.mxu0 0.0
    %1735 = vmatpush2.msra.mxu0 0.0
    %1736 = vmatprep.subr.mxu0 0.0
    %1737 = vmatpush2.msra.mxu0 0.0
    %1738 = vmatprep.mubr.f32.mxu0 0.0
    %v1739 = vand.u32 %v1071, 4294901760
    %1740 = vmatmul.mubr.f32.gmra.mxu0 %v1739
    %v1741 = vpop.f32.mrf.mxu0
    %v1742 = vadd.f32 %v1652, %v1741
    %v1743 = vpop.f32.mrf.mxu0
    %v1744 = vadd.f32 %v1654, %v1743
    %1745 = vdwg.mxu0
    %v1746 = vadd.f32 %v1742, %v1744
    %1747 = vadd.xlane.f32.xlu0 %v1746
    %v1748 = vpop.xlane.xlu0 %1747
    %v1749 = vmul.f32 %v1748, 0.00390625
    %v1750 = vsub.f32 %v1742, %v1749
    %v1751 = vsub.f32 %v1744, %v1749
    %v1752 = vmul.f32 %v1750, %v1750
    %v1753 = vmul.f32 %v1751, %v1751
    %v1754 = vadd.f32 %v1752, %v1753
    %1755 = vadd.xlane.f32.xlu0 %v1754
    %v1756 = vpop.xlane.xlu0 %1755
    %v1757 = vmul.f32 %v1756, 0.00390625
    %v1758 = vadd.f32 %v1757, 1e-05
    %v1759 = vrsqrt.pop %v1758
    %v1760 = vmul.f32 %v1750, %v1759
    %v1761 = vmul.f32 %v1751, %v1759
    %v1762 = vadd.f32 %v1760, %v67
    %v1763 = vadd.f32 %v1761, %v68
    %v1764 = vmax.f32 %v1762, 0.0
    %v1765 = vmax.f32 %v1763, 0.0
    %1766 = vst [vmem:[#allocation11] sm:$0xff] %v1764
    %1767 = vst [vmem:[#allocation11 + $0x8] sm:$0xff] %v1765
    // Predicated region
    $region34: #{tpu_custom_call.1} parent=1 // pred_check
      _
    $region35: #{tpu_custom_call.1} parent=1 // pred_check_branch
      %1769 = sbr.rel (0) target = $region37
    $region36: #{tpu_custom_call.1} parent=1 // pred_region
      %s1771 = ssub.s32 256, 256
      %1772 = vsyncadd [#allocation5], %s1771
      %s1774 = sshll.u32 [#allocation11], 4
      %s1775 = int_to_ptr.vmem [resolvable:$true] %s1774
      %1777 = dma.vmem_to_hbm [thread:$0]  %s1775, 256, %s4, [#allocation5]
    $region37: #{tpu_custom_call.1} parent=1 // pred_fallthru
      _
    // Predicated region
    $region38: #{tpu_custom_call.1} parent=1 // pred_check
      _
    $region39: #{tpu_custom_call.1} parent=1 // pred_check_branch
      %1779 = sbr.rel (0) target = $region41
    $region40: #{tpu_custom_call.1} parent=1 // pred_region
      %1780 = dma.done [#allocation5], 256
    $region41: #{tpu_custom_call.1} parent=1 // pred_fallthru
      _
    %1781 = vsyncpa [#allocation4], 1
    %1782 = vsyncpa [#allocation7], 1
    %1783 = vsyncpa [#allocation10], 1
    %1784 = vsyncpa [#allocation5], 1

</llo_original>
